<compile_context>
chip_gen: v7x
topology: tpu7x:2x2x1
jax: 0.10.0
libtpu: 0.0.40
codegen_flags: <defaults>
</compile_context>

<pallas_src>
import functools

import jax
import jax.numpy as jnp
from jax.experimental import pallas as pl
from jax.experimental.pallas import tpu as pltpu


# ----------------------------------------------------------------------------
# Fused Pallas kernel: one batch element per grid step, all K ranges inside.
# ----------------------------------------------------------------------------
def _bgcn_kernel(x_ref, mT_ref, m_ref, anp_ref, aep_ref, wb_ref,
                 we_ref, wn0_ref, wnx_ref, wnz_ref, out_ref, *, K):
    bf16 = jnp.bfloat16

    def dot(a, b):
        # bf16 MXU operands, f32 accumulation.
        return jnp.dot(a.astype(bf16), b.astype(bf16),
                       preferred_element_type=jnp.float32)

    X = x_ref[0]              # (V, Cp)  f32  this batch element's node feats
    MT = mT_ref[...]          # (E, V)   bf16 incidence^T
    Mb = m_ref[...]           # (V, E)   bf16 incidence

    # Z0 = (M^T @ X) @ W_b : initial edge features  -> (E, Cp)
    Z = dot(dot(MT, X), wb_ref[...])

    for k in range(K):        # K is static -> fully unrolled at trace time
        # Edge GCN:  Z <- ReLU( A_e^{k+1} @ (Z @ W_e[k]) )
        Z = jnp.maximum(dot(aep_ref[k], dot(Z, we_ref[k])), 0.0)

        # Node GCN:  X <- ReLU( A_n^{k+1} @ ([X || M@Z] @ W_n[k]) )
        # Concat fused away via row-split weights (W_x, W_z).
        if k == 0:
            H = dot(X, wn0_ref[...])
        else:
            H = dot(X, wnx_ref[k - 1]) + dot(dot(Mb, Z), wnz_ref[k - 1])
        X = jnp.maximum(dot(anp_ref[k], H), 0.0)

        out_ref[k, 0] = X     # lane-dense (V, 128) store


def bgcn_forward(prep, X, *, cout):
    """X: (B, V, dim_in_node) f32 -> (K, B, V, dim_out_node) f32."""
    B, V, Cin = X.shape
    K, E, _ = prep["Ae_pows"].shape
    Cp = prep["Wn0"].shape[0]
    Km1 = prep["Wnx"].shape[0]

    # Zero-pad channels to the lane-dense width Cp (tiny one-time pad).
    Xp = jnp.zeros((B, V, Cp), jnp.float32).at[:, :, :Cin].set(X)

    operands = (Xp, prep["MT"], prep["M"], prep["An_pows"], prep["Ae_pows"],
                prep["Wb"], prep["We"], prep["Wn0"], prep["Wnx"], prep["Wnz"])

    # Advisory cost estimate (per-batch, no adjacency-power N^3 terms).
    flops_per_b = 2 * E * V * Cp + 2 * E * Cp * Cp            # Z0
    for k in range(K):
        flops_per_b += 2 * E * Cp * Cp + 2 * E * E * Cp       # edge GCN
        if k == 0:
            flops_per_b += 2 * V * Cp * Cp                    # X @ Wn0
        else:
            flops_per_b += 4 * V * Cp * Cp + 2 * V * E * Cp   # split concat
        flops_per_b += 2 * V * V * Cp                          # node prop
    flops = B * flops_per_b
    bytes_accessed = (sum(int(o.size) * o.dtype.itemsize for o in operands)
                      + K * B * V * Cp * 4)

    const2 = lambda b: (0, 0)
    const3 = lambda b: (0, 0, 0)

    out = pl.pallas_call(
        functools.partial(_bgcn_kernel, K=K),
        out_shape=jax.ShapeDtypeStruct((K, B, V, Cp), jnp.float32),
        grid=(B,),
        in_specs=[
            pl.BlockSpec((1, V, Cp), lambda b: (b, 0, 0)),   # X (per batch)
            pl.BlockSpec((E, V), const2),                    # M^T
            pl.BlockSpec((V, E), const2),                    # M
            pl.BlockSpec((K, V, V), const3),                 # A_node^{k+1}
            pl.BlockSpec((K, E, E), const3),                 # A_edge^{k+1}
            pl.BlockSpec((Cp, Cp), const2),                  # W_b
            pl.BlockSpec((K, Cp, Cp), const3),               # W_edge
            pl.BlockSpec((Cp, Cp), const2),                  # W_node[0]
            pl.BlockSpec((Km1, Cp, Cp), const3),             # W_node[k>0] X-part
            pl.BlockSpec((Km1, Cp, Cp), const3),             # W_node[k>0] Z-part
        ],
        out_specs=pl.BlockSpec((K, 1, V, Cp), lambda b: (0, b, 0, 0)),
        compiler_params=pltpu.CompilerParams(
            dimension_semantics=("parallel",),
            vmem_limit_bytes=32 * 1024 * 1024),
        cost_estimate=pl.CostEstimate(
            flops=flops, transcendentals=0, bytes_accessed=bytes_accessed),
    )(*operands)

    return out[..., :cout]                 # (K, B, V, Cout)


# ----------------------------------------------------------------------------
# Deterministic parameter / graph construction.
# ----------------------------------------------------------------------------
def build_graph(V):
    """Ring graph with V nodes and E=V undirected edges e: (e <-> (e+1)%V)."""
    E = V
    M = [[0.0] * E for _ in range(V)]
    A_node = [[0.0] * V for _ in range(V)]
    for e in range(E):
        i, j = e, (e + 1) % V
        M[i][e] = 1.0
        M[j][e] = 1.0
        A_node[i][j] = 1.0
        A_node[j][i] = 1.0
    for i in range(V):
        A_node[i][i] = 1.0
    # line-graph adjacency for edges (edges adjacent iff they share a node)
    A_edge = [[0.0] * E for _ in range(E)]
    for e in range(E):
        for f in range(E):
            if {e, (e + 1) % V} & {f, (f + 1) % V}:
                A_edge[e][f] = 1.0
    adj_node = jnp.array(A_node, dtype=jnp.float32)
    adj_edge = jnp.array(A_edge, dtype=jnp.float32)
    adj_node = adj_node / jnp.sum(adj_node, axis=1, keepdims=True)
    adj_edge = adj_edge / jnp.sum(adj_edge, axis=1, keepdims=True)
    return jnp.array(M, dtype=jnp.float32), adj_node, adj_edge


def init_params(key, V, E, dim_in_node, dim_out_node, dim_out_edge, K):
    M, adj_node, adj_edge = build_graph(V)
    keys = jax.random.split(key, 2 * K + 1)
    W_node = []
    for k in range(K):
        din = dim_in_node if k == 0 else dim_out_node + dim_out_edge
        W_node.append(0.1 * jax.random.normal(keys[k], (din, dim_out_node),
                                              dtype=jnp.float32))
    W_edge = [0.1 * jax.random.normal(keys[K + k], (dim_out_edge, dim_out_edge),
                                      dtype=jnp.float32) for k in range(K)]
    W_b = 0.1 * jax.random.normal(keys[2 * K], (dim_in_node, dim_out_edge),
                                  dtype=jnp.float32)
    return {
        "M": M, "adj_node": adj_node, "adj_edge": adj_edge,
        "W_node": W_node, "W_edge": W_edge, "W_b": W_b, "K": K,
    }


def prepare(params, pad_width=128):
    """One-time preprocessing (outside the hot path):
      * precompute the static adjacency powers A^{k+1} on the small matrices,
      * row-split / stack the node weights so the kernel needs no concat,
      * zero-pad all channel dims to the lane-dense width (128),
      * store MXU operands (graph matrices, weights) in bf16."""
    bf16 = jnp.bfloat16
    Cp = pad_width
    M, An, Ae = params["M"], params["adj_node"], params["adj_edge"]
    K = params["K"]
    Cout = params["W_node"][0].shape[1]

    # Static adjacency powers A^{k+1}, k = 0..K-1 (input-independent).
    an_pows, ae_pows = [An], [Ae]
    for _ in range(1, K):
        an_pows.append(an_pows[-1] @ An)
        ae_pows.append(ae_pows[-1] @ Ae)

    def pad2(W):
        out = jnp.zeros((Cp, Cp), jnp.float32)
        return out.at[:W.shape[0], :W.shape[1]].set(W).astype(bf16)

    if K > 1:
        Wnx = jnp.stack([pad2(params["W_node"][k][:Cout, :])
                         for k in range(1, K)])
        Wnz = jnp.stack([pad2(params["W_node"][k][Cout:, :])
                         for k in range(1, K)])
    else:  # statically-dead dummies (the k>0 branch is never traced for K==1)
        Wnx = jnp.zeros((1, Cp, Cp), bf16)
        Wnz = jnp.zeros((1, Cp, Cp), bf16)

    return {
        "M": M.astype(bf16),
        "MT": M.T.astype(bf16),
        "An_pows": jnp.stack(an_pows).astype(bf16),
        "Ae_pows": jnp.stack(ae_pows).astype(bf16),
        "Wb": pad2(params["W_b"]),
        "We": jnp.stack([pad2(w) for w in params["W_edge"]]),
        "Wn0": pad2(params["W_node"][0]),
        "Wnx": Wnx,
        "Wnz": Wnz,
    }


if __name__ == "__main__":
    B, V, dim_in_node = 2, 16, 4
    dim_out_node, dim_out_edge, K = 8, 8, 3
    E = V  # ring graph

    key = jax.random.PRNGKey(0)
    k_param, k_x = jax.random.split(key)
    params = init_params(k_param, V, E, dim_in_node, dim_out_node,
                         dim_out_edge, K)
    prep = jax.block_until_ready(prepare(params))
    X = jax.random.normal(k_x, (B, V, dim_in_node), dtype=jnp.float32)

    fwd = jax.jit(functools.partial(bgcn_forward, cout=dim_out_node))
    out = jax.block_until_ready(fwd(prep, X))

    assert out.shape == (K, B, V, dim_out_node), out.shape
    assert out.dtype == jnp.float32
    assert bool(jnp.all(jnp.isfinite(out)))
    print("KERNEL_OK")
</pallas_src>

<mosaic_0001>
module attributes {stable_mosaic.version = 11 : i64} {
  func.func @_bgcn_kernel(%arg0: i32, %arg1: memref<1x16x128xf32, #tpu.memory_space<vmem>>, %arg2: memref<16x16xbf16, #tpu.memory_space<vmem>>, %arg3: memref<16x16xbf16, #tpu.memory_space<vmem>>, %arg4: memref<3x16x16xbf16, #tpu.memory_space<vmem>>, %arg5: memref<3x16x16xbf16, #tpu.memory_space<vmem>>, %arg6: memref<128x128xbf16, #tpu.memory_space<vmem>>, %arg7: memref<3x128x128xbf16, #tpu.memory_space<vmem>>, %arg8: memref<128x128xbf16, #tpu.memory_space<vmem>>, %arg9: memref<2x128x128xbf16, #tpu.memory_space<vmem>>, %arg10: memref<2x128x128xbf16, #tpu.memory_space<vmem>>, %arg11: memref<3x1x16x128xf32, #tpu.memory_space<vmem>>) attributes {dimension_semantics = [#tpu.dimension_semantics<parallel>], iteration_bounds = array<i64: 2>, scalar_prefetch = 0 : i64, scratch_operands = 0 : i64, tpu.core_type = #tpu.core_type<tc>, window_params = [{transform_indices = @transform_0, window_bounds = array<i64: 1, 16, 128>}, {pipeline_mode = #tpu.pipeline_mode<synchronous>, transform_indices = @transform_1, window_bounds = array<i64: 16, 16>}, {pipeline_mode = #tpu.pipeline_mode<synchronous>, transform_indices = @transform_2, window_bounds = array<i64: 16, 16>}, {pipeline_mode = #tpu.pipeline_mode<synchronous>, transform_indices = @transform_3, window_bounds = array<i64: 3, 16, 16>}, {pipeline_mode = #tpu.pipeline_mode<synchronous>, transform_indices = @transform_4, window_bounds = array<i64: 3, 16, 16>}, {pipeline_mode = #tpu.pipeline_mode<synchronous>, transform_indices = @transform_5, window_bounds = array<i64: 128, 128>}, {pipeline_mode = #tpu.pipeline_mode<synchronous>, transform_indices = @transform_6, window_bounds = array<i64: 3, 128, 128>}, {pipeline_mode = #tpu.pipeline_mode<synchronous>, transform_indices = @transform_7, window_bounds = array<i64: 128, 128>}, {pipeline_mode = #tpu.pipeline_mode<synchronous>, transform_indices = @transform_8, window_bounds = array<i64: 2, 128, 128>}, {pipeline_mode = #tpu.pipeline_mode<synchronous>, transform_indices = @transform_9, window_bounds = array<i64: 2, 128, 128>}, {transform_indices = @transform_10, window_bounds = array<i64: 3, 1, 16, 128>}]} {
    %c0 = arith.constant 0 : index
    %c0_0 = arith.constant 0 : index
    %c0_1 = arith.constant 0 : index
    %0 = vector.load %arg1[%c0, %c0_0, %c0_1] : memref<1x16x128xf32, #tpu.memory_space<vmem>>, vector<1x16x128xf32>
    %1 = vector.shape_cast %0 : vector<1x16x128xf32> to vector<16x128xf32>
    %c0_2 = arith.constant 0 : index
    %c0_3 = arith.constant 0 : index
    %2 = vector.load %arg2[%c0_2, %c0_3] : memref<16x16xbf16, #tpu.memory_space<vmem>>, vector<16x16xbf16>
    %c0_4 = arith.constant 0 : index
    %c0_5 = arith.constant 0 : index
    %3 = vector.load %arg3[%c0_4, %c0_5] : memref<16x16xbf16, #tpu.memory_space<vmem>>, vector<16x16xbf16>
    %4 = arith.truncf %1 : vector<16x128xf32> to vector<16x128xbf16>
    %cst = arith.constant dense<0.000000e+00> : vector<16x128xf32>
    %5 = tpu.matmul %2, %4, %cst {dimension_numbers = #tpu.dot_dimension_numbers<[1], [0], [0], [1], [0, 0, 1, 1], [], []>} : vector<16x16xbf16>, vector<16x128xbf16>, vector<16x128xf32> -> vector<16x128xf32>
    %c0_6 = arith.constant 0 : index
    %c0_7 = arith.constant 0 : index
    %6 = vector.load %arg6[%c0_6, %c0_7] : memref<128x128xbf16, #tpu.memory_space<vmem>>, vector<128x128xbf16>
    %7 = arith.truncf %5 : vector<16x128xf32> to vector<16x128xbf16>
    %cst_8 = arith.constant dense<0.000000e+00> : vector<16x128xf32>
    %8 = tpu.matmul %7, %6, %cst_8 {dimension_numbers = #tpu.dot_dimension_numbers<[1], [0], [0], [1], [0, 0, 1, 1], [], []>} : vector<16x128xbf16>, vector<128x128xbf16>, vector<16x128xf32> -> vector<16x128xf32>
    %c0_9 = arith.constant 0 : index
    %c0_10 = arith.constant 0 : index
    %c0_11 = arith.constant 0 : index
    %9 = vector.load %arg5[%c0_9, %c0_10, %c0_11] : memref<3x16x16xbf16, #tpu.memory_space<vmem>>, vector<1x16x16xbf16>
    %10 = vector.shape_cast %9 : vector<1x16x16xbf16> to vector<16x16xbf16>
    %c0_12 = arith.constant 0 : index
    %c0_13 = arith.constant 0 : index
    %c0_14 = arith.constant 0 : index
    %11 = vector.load %arg7[%c0_12, %c0_13, %c0_14] : memref<3x128x128xbf16, #tpu.memory_space<vmem>>, vector<1x128x128xbf16>
    %12 = vector.shape_cast %11 : vector<1x128x128xbf16> to vector<128x128xbf16>
    %13 = arith.truncf %8 : vector<16x128xf32> to vector<16x128xbf16>
    %cst_15 = arith.constant dense<0.000000e+00> : vector<16x128xf32>
    %14 = tpu.matmul %13, %12, %cst_15 {dimension_numbers = #tpu.dot_dimension_numbers<[1], [0], [0], [1], [0, 0, 1, 1], [], []>} : vector<16x128xbf16>, vector<128x128xbf16>, vector<16x128xf32> -> vector<16x128xf32>
    %15 = arith.truncf %14 : vector<16x128xf32> to vector<16x128xbf16>
    %cst_16 = arith.constant dense<0.000000e+00> : vector<16x128xf32>
    %16 = tpu.matmul %10, %15, %cst_16 {dimension_numbers = #tpu.dot_dimension_numbers<[1], [0], [0], [1], [0, 0, 1, 1], [], []>} : vector<16x16xbf16>, vector<16x128xbf16>, vector<16x128xf32> -> vector<16x128xf32>
    %cst_17 = arith.constant 0.000000e+00 : f32
    %17 = vector.broadcast %cst_17 : f32 to vector<16x128xf32>
    %18 = arith.maximumf %16, %17 : vector<16x128xf32>
    %c0_18 = arith.constant 0 : index
    %c0_19 = arith.constant 0 : index
    %19 = vector.load %arg8[%c0_18, %c0_19] : memref<128x128xbf16, #tpu.memory_space<vmem>>, vector<128x128xbf16>
    %20 = arith.truncf %1 : vector<16x128xf32> to vector<16x128xbf16>
    %cst_20 = arith.constant dense<0.000000e+00> : vector<16x128xf32>
    %21 = tpu.matmul %20, %19, %cst_20 {dimension_numbers = #tpu.dot_dimension_numbers<[1], [0], [0], [1], [0, 0, 1, 1], [], []>} : vector<16x128xbf16>, vector<128x128xbf16>, vector<16x128xf32> -> vector<16x128xf32>
    %c0_21 = arith.constant 0 : index
    %c0_22 = arith.constant 0 : index
    %c0_23 = arith.constant 0 : index
    %22 = vector.load %arg4[%c0_21, %c0_22, %c0_23] : memref<3x16x16xbf16, #tpu.memory_space<vmem>>, vector<1x16x16xbf16>
    %23 = vector.shape_cast %22 : vector<1x16x16xbf16> to vector<16x16xbf16>
    %24 = arith.truncf %21 : vector<16x128xf32> to vector<16x128xbf16>
    %cst_24 = arith.constant dense<0.000000e+00> : vector<16x128xf32>
    %25 = tpu.matmul %23, %24, %cst_24 {dimension_numbers = #tpu.dot_dimension_numbers<[1], [0], [0], [1], [0, 0, 1, 1], [], []>} : vector<16x16xbf16>, vector<16x128xbf16>, vector<16x128xf32> -> vector<16x128xf32>
    %cst_25 = arith.constant 0.000000e+00 : f32
    %26 = vector.broadcast %cst_25 : f32 to vector<16x128xf32>
    %27 = arith.maximumf %25, %26 : vector<16x128xf32>
    %c0_26 = arith.constant 0 : index
    %c0_27 = arith.constant 0 : index
    %c0_28 = arith.constant 0 : index
    %c0_29 = arith.constant 0 : index
    %28 = vector.load %arg11[%c0_26, %c0_27, %c0_28, %c0_29] : memref<3x1x16x128xf32, #tpu.memory_space<vmem>>, vector<1x1x16x128xf32>
    %29 = vector.shape_cast %28 : vector<1x1x16x128xf32> to vector<16x128xf32>
    %30 = vector.shape_cast %27 : vector<16x128xf32> to vector<1x1x16x128xf32>
    tpu.vector_store %arg11[%c0_26, %c0_27, %c0_28, %c0_29], %30 {strides = array<i32>} : memref<3x1x16x128xf32, #tpu.memory_space<vmem>>, vector<1x1x16x128xf32>,
    %c1 = arith.constant 1 : index
    %c0_30 = arith.constant 0 : index
    %c0_31 = arith.constant 0 : index
    %31 = vector.load %arg5[%c1, %c0_30, %c0_31] : memref<3x16x16xbf16, #tpu.memory_space<vmem>>, vector<1x16x16xbf16>
    %32 = vector.shape_cast %31 : vector<1x16x16xbf16> to vector<16x16xbf16>
    %c1_32 = arith.constant 1 : index
    %c0_33 = arith.constant 0 : index
    %c0_34 = arith.constant 0 : index
    %33 = vector.load %arg7[%c1_32, %c0_33, %c0_34] : memref<3x128x128xbf16, #tpu.memory_space<vmem>>, vector<1x128x128xbf16>
    %34 = vector.shape_cast %33 : vector<1x128x128xbf16> to vector<128x128xbf16>
    %35 = arith.truncf %18 : vector<16x128xf32> to vector<16x128xbf16>
    %cst_35 = arith.constant dense<0.000000e+00> : vector<16x128xf32>
    %36 = tpu.matmul %35, %34, %cst_35 {dimension_numbers = #tpu.dot_dimension_numbers<[1], [0], [0], [1], [0, 0, 1, 1], [], []>} : vector<16x128xbf16>, vector<128x128xbf16>, vector<16x128xf32> -> vector<16x128xf32>
    %37 = arith.truncf %36 : vector<16x128xf32> to vector<16x128xbf16>
    %cst_36 = arith.constant dense<0.000000e+00> : vector<16x128xf32>
    %38 = tpu.matmul %32, %37, %cst_36 {dimension_numbers = #tpu.dot_dimension_numbers<[1], [0], [0], [1], [0, 0, 1, 1], [], []>} : vector<16x16xbf16>, vector<16x128xbf16>, vector<16x128xf32> -> vector<16x128xf32>
    %cst_37 = arith.constant 0.000000e+00 : f32
    %39 = vector.broadcast %cst_37 : f32 to vector<16x128xf32>
    %40 = arith.maximumf %38, %39 : vector<16x128xf32>
    %c0_38 = arith.constant 0 : index
    %c0_39 = arith.constant 0 : index
    %c0_40 = arith.constant 0 : index
    %41 = vector.load %arg9[%c0_38, %c0_39, %c0_40] : memref<2x128x128xbf16, #tpu.memory_space<vmem>>, vector<1x128x128xbf16>
    %42 = vector.shape_cast %41 : vector<1x128x128xbf16> to vector<128x128xbf16>
    %43 = arith.truncf %27 : vector<16x128xf32> to vector<16x128xbf16>
    %cst_41 = arith.constant dense<0.000000e+00> : vector<16x128xf32>
    %44 = tpu.matmul %43, %42, %cst_41 {dimension_numbers = #tpu.dot_dimension_numbers<[1], [0], [0], [1], [0, 0, 1, 1], [], []>} : vector<16x128xbf16>, vector<128x128xbf16>, vector<16x128xf32> -> vector<16x128xf32>
    %45 = arith.truncf %40 : vector<16x128xf32> to vector<16x128xbf16>
    %cst_42 = arith.constant dense<0.000000e+00> : vector<16x128xf32>
    %46 = tpu.matmul %3, %45, %cst_42 {dimension_numbers = #tpu.dot_dimension_numbers<[1], [0], [0], [1], [0, 0, 1, 1], [], []>} : vector<16x16xbf16>, vector<16x128xbf16>, vector<16x128xf32> -> vector<16x128xf32>
    %c0_43 = arith.constant 0 : index
    %c0_44 = arith.constant 0 : index
    %c0_45 = arith.constant 0 : index
    %47 = vector.load %arg10[%c0_43, %c0_44, %c0_45] : memref<2x128x128xbf16, #tpu.memory_space<vmem>>, vector<1x128x128xbf16>
    %48 = vector.shape_cast %47 : vector<1x128x128xbf16> to vector<128x128xbf16>
    %49 = arith.truncf %46 : vector<16x128xf32> to vector<16x128xbf16>
    %cst_46 = arith.constant dense<0.000000e+00> : vector<16x128xf32>
    %50 = tpu.matmul %49, %48, %cst_46 {dimension_numbers = #tpu.dot_dimension_numbers<[1], [0], [0], [1], [0, 0, 1, 1], [], []>} : vector<16x128xbf16>, vector<128x128xbf16>, vector<16x128xf32> -> vector<16x128xf32>
    %51 = arith.addf %44, %50 : vector<16x128xf32>
    %c1_47 = arith.constant 1 : index
    %c0_48 = arith.constant 0 : index
    %c0_49 = arith.constant 0 : index
    %52 = vector.load %arg4[%c1_47, %c0_48, %c0_49] : memref<3x16x16xbf16, #tpu.memory_space<vmem>>, vector<1x16x16xbf16>
    %53 = vector.shape_cast %52 : vector<1x16x16xbf16> to vector<16x16xbf16>
    %54 = arith.truncf %51 : vector<16x128xf32> to vector<16x128xbf16>
    %cst_50 = arith.constant dense<0.000000e+00> : vector<16x128xf32>
    %55 = tpu.matmul %53, %54, %cst_50 {dimension_numbers = #tpu.dot_dimension_numbers<[1], [0], [0], [1], [0, 0, 1, 1], [], []>} : vector<16x16xbf16>, vector<16x128xbf16>, vector<16x128xf32> -> vector<16x128xf32>
    %cst_51 = arith.constant 0.000000e+00 : f32
    %56 = vector.broadcast %cst_51 : f32 to vector<16x128xf32>
    %57 = arith.maximumf %55, %56 : vector<16x128xf32>
    %c1_52 = arith.constant 1 : index
    %c0_53 = arith.constant 0 : index
    %c0_54 = arith.constant 0 : index
    %c0_55 = arith.constant 0 : index
    %58 = vector.load %arg11[%c1_52, %c0_53, %c0_54, %c0_55] : memref<3x1x16x128xf32, #tpu.memory_space<vmem>>, vector<1x1x16x128xf32>
    %59 = vector.shape_cast %58 : vector<1x1x16x128xf32> to vector<16x128xf32>
    %60 = vector.shape_cast %57 : vector<16x128xf32> to vector<1x1x16x128xf32>
    tpu.vector_store %arg11[%c1_52, %c0_53, %c0_54, %c0_55], %60 {strides = array<i32>} : memref<3x1x16x128xf32, #tpu.memory_space<vmem>>, vector<1x1x16x128xf32>,
    %c2 = arith.constant 2 : index
    %c0_56 = arith.constant 0 : index
    %c0_57 = arith.constant 0 : index
    %61 = vector.load %arg5[%c2, %c0_56, %c0_57] : memref<3x16x16xbf16, #tpu.memory_space<vmem>>, vector<1x16x16xbf16>
    %62 = vector.shape_cast %61 : vector<1x16x16xbf16> to vector<16x16xbf16>
    %c2_58 = arith.constant 2 : index
    %c0_59 = arith.constant 0 : index
    %c0_60 = arith.constant 0 : index
    %63 = vector.load %arg7[%c2_58, %c0_59, %c0_60] : memref<3x128x128xbf16, #tpu.memory_space<vmem>>, vector<1x128x128xbf16>
    %64 = vector.shape_cast %63 : vector<1x128x128xbf16> to vector<128x128xbf16>
    %65 = arith.truncf %40 : vector<16x128xf32> to vector<16x128xbf16>
    %cst_61 = arith.constant dense<0.000000e+00> : vector<16x128xf32>
    %66 = tpu.matmul %65, %64, %cst_61 {dimension_numbers = #tpu.dot_dimension_numbers<[1], [0], [0], [1], [0, 0, 1, 1], [], []>} : vector<16x128xbf16>, vector<128x128xbf16>, vector<16x128xf32> -> vector<16x128xf32>
    %67 = arith.truncf %66 : vector<16x128xf32> to vector<16x128xbf16>
    %cst_62 = arith.constant dense<0.000000e+00> : vector<16x128xf32>
    %68 = tpu.matmul %62, %67, %cst_62 {dimension_numbers = #tpu.dot_dimension_numbers<[1], [0], [0], [1], [0, 0, 1, 1], [], []>} : vector<16x16xbf16>, vector<16x128xbf16>, vector<16x128xf32> -> vector<16x128xf32>
    %cst_63 = arith.constant 0.000000e+00 : f32
    %69 = vector.broadcast %cst_63 : f32 to vector<16x128xf32>
    %70 = arith.maximumf %68, %69 : vector<16x128xf32>
    %c1_64 = arith.constant 1 : index
    %c0_65 = arith.constant 0 : index
    %c0_66 = arith.constant 0 : index
    %71 = vector.load %arg9[%c1_64, %c0_65, %c0_66] : memref<2x128x128xbf16, #tpu.memory_space<vmem>>, vector<1x128x128xbf16>
    %72 = vector.shape_cast %71 : vector<1x128x128xbf16> to vector<128x128xbf16>
    %73 = arith.truncf %57 : vector<16x128xf32> to vector<16x128xbf16>
    %cst_67 = arith.constant dense<0.000000e+00> : vector<16x128xf32>
    %74 = tpu.matmul %73, %72, %cst_67 {dimension_numbers = #tpu.dot_dimension_numbers<[1], [0], [0], [1], [0, 0, 1, 1], [], []>} : vector<16x128xbf16>, vector<128x128xbf16>, vector<16x128xf32> -> vector<16x128xf32>
    %75 = arith.truncf %70 : vector<16x128xf32> to vector<16x128xbf16>
    %cst_68 = arith.constant dense<0.000000e+00> : vector<16x128xf32>
    %76 = tpu.matmul %3, %75, %cst_68 {dimension_numbers = #tpu.dot_dimension_numbers<[1], [0], [0], [1], [0, 0, 1, 1], [], []>} : vector<16x16xbf16>, vector<16x128xbf16>, vector<16x128xf32> -> vector<16x128xf32>
    %c1_69 = arith.constant 1 : index
    %c0_70 = arith.constant 0 : index
    %c0_71 = arith.constant 0 : index
    %77 = vector.load %arg10[%c1_69, %c0_70, %c0_71] : memref<2x128x128xbf16, #tpu.memory_space<vmem>>, vector<1x128x128xbf16>
    %78 = vector.shape_cast %77 : vector<1x128x128xbf16> to vector<128x128xbf16>
    %79 = arith.truncf %76 : vector<16x128xf32> to vector<16x128xbf16>
    %cst_72 = arith.constant dense<0.000000e+00> : vector<16x128xf32>
    %80 = tpu.matmul %79, %78, %cst_72 {dimension_numbers = #tpu.dot_dimension_numbers<[1], [0], [0], [1], [0, 0, 1, 1], [], []>} : vector<16x128xbf16>, vector<128x128xbf16>, vector<16x128xf32> -> vector<16x128xf32>
    %81 = arith.addf %74, %80 : vector<16x128xf32>
    %c2_73 = arith.constant 2 : index
    %c0_74 = arith.constant 0 : index
    %c0_75 = arith.constant 0 : index
    %82 = vector.load %arg4[%c2_73, %c0_74, %c0_75] : memref<3x16x16xbf16, #tpu.memory_space<vmem>>, vector<1x16x16xbf16>
    %83 = vector.shape_cast %82 : vector<1x16x16xbf16> to vector<16x16xbf16>
    %84 = arith.truncf %81 : vector<16x128xf32> to vector<16x128xbf16>
    %cst_76 = arith.constant dense<0.000000e+00> : vector<16x128xf32>
    %85 = tpu.matmul %83, %84, %cst_76 {dimension_numbers = #tpu.dot_dimension_numbers<[1], [0], [0], [1], [0, 0, 1, 1], [], []>} : vector<16x16xbf16>, vector<16x128xbf16>, vector<16x128xf32> -> vector<16x128xf32>
    %cst_77 = arith.constant 0.000000e+00 : f32
    %86 = vector.broadcast %cst_77 : f32 to vector<16x128xf32>
    %87 = arith.maximumf %85, %86 : vector<16x128xf32>
    %c2_78 = arith.constant 2 : index
    %c0_79 = arith.constant 0 : index
    %c0_80 = arith.constant 0 : index
    %c0_81 = arith.constant 0 : index
    %88 = vector.load %arg11[%c2_78, %c0_79, %c0_80, %c0_81] : memref<3x1x16x128xf32, #tpu.memory_space<vmem>>, vector<1x1x16x128xf32>
    %89 = vector.shape_cast %88 : vector<1x1x16x128xf32> to vector<16x128xf32>
    %90 = vector.shape_cast %87 : vector<16x128xf32> to vector<1x1x16x128xf32>
    tpu.vector_store %arg11[%c2_78, %c0_79, %c0_80, %c0_81], %90 {strides = array<i32>} : memref<3x1x16x128xf32, #tpu.memory_space<vmem>>, vector<1x1x16x128xf32>,
    return
  }
  func.func @transform_0(%arg0: i32) -> (i32, i32, i32) {
    %c0_i32 = arith.constant 0 : i32
    %c0_i32_0 = arith.constant 0 : i32
    %c0_i32_1 = arith.constant 0 : i32
    return %arg0, %c0_i32, %c0_i32_0 : i32, i32, i32
  }
  func.func @transform_1(%arg0: i32) -> (i32, i32) {
    %c0_i32 = arith.constant 0 : i32
    %c0_i32_0 = arith.constant 0 : i32
    %c0_i32_1 = arith.constant 0 : i32
    return %c0_i32, %c0_i32_0 : i32, i32
  }
  func.func @transform_2(%arg0: i32) -> (i32, i32) {
    %c0_i32 = arith.constant 0 : i32
    %c0_i32_0 = arith.constant 0 : i32
    %c0_i32_1 = arith.constant 0 : i32
    return %c0_i32, %c0_i32_0 : i32, i32
  }
  func.func @transform_3(%arg0: i32) -> (i32, i32, i32) {
    %c0_i32 = arith.constant 0 : i32
    %c0_i32_0 = arith.constant 0 : i32
    %c0_i32_1 = arith.constant 0 : i32
    %c0_i32_2 = arith.constant 0 : i32
    return %c0_i32, %c0_i32_0, %c0_i32_1 : i32, i32, i32
  }
  func.func @transform_4(%arg0: i32) -> (i32, i32, i32) {
    %c0_i32 = arith.constant 0 : i32
    %c0_i32_0 = arith.constant 0 : i32
    %c0_i32_1 = arith.constant 0 : i32
    %c0_i32_2 = arith.constant 0 : i32
    return %c0_i32, %c0_i32_0, %c0_i32_1 : i32, i32, i32
  }
  func.func @transform_5(%arg0: i32) -> (i32, i32) {
    %c0_i32 = arith.constant 0 : i32
    %c0_i32_0 = arith.constant 0 : i32
    %c0_i32_1 = arith.constant 0 : i32
    return %c0_i32, %c0_i32_0 : i32, i32
  }
  func.func @transform_6(%arg0: i32) -> (i32, i32, i32) {
    %c0_i32 = arith.constant 0 : i32
    %c0_i32_0 = arith.constant 0 : i32
    %c0_i32_1 = arith.constant 0 : i32
    %c0_i32_2 = arith.constant 0 : i32
    return %c0_i32, %c0_i32_0, %c0_i32_1 : i32, i32, i32
  }
  func.func @transform_7(%arg0: i32) -> (i32, i32) {
    %c0_i32 = arith.constant 0 : i32
    %c0_i32_0 = arith.constant 0 : i32
    %c0_i32_1 = arith.constant 0 : i32
    return %c0_i32, %c0_i32_0 : i32, i32
  }
  func.func @transform_8(%arg0: i32) -> (i32, i32, i32) {
    %c0_i32 = arith.constant 0 : i32
    %c0_i32_0 = arith.constant 0 : i32
    %c0_i32_1 = arith.constant 0 : i32
    %c0_i32_2 = arith.constant 0 : i32
    return %c0_i32, %c0_i32_0, %c0_i32_1 : i32, i32, i32
  }
  func.func @transform_9(%arg0: i32) -> (i32, i32, i32) {
    %c0_i32 = arith.constant 0 : i32
    %c0_i32_0 = arith.constant 0 : i32
    %c0_i32_1 = arith.constant 0 : i32
    %c0_i32_2 = arith.constant 0 : i32
    return %c0_i32, %c0_i32_0, %c0_i32_1 : i32, i32, i32
  }
  func.func @transform_10(%arg0: i32) -> (i32, i32, i32, i32) {
    %c0_i32 = arith.constant 0 : i32
    %c0_i32_0 = arith.constant 0 : i32
    %c0_i32_1 = arith.constant 0 : i32
    %c0_i32_2 = arith.constant 0 : i32
    return %c0_i32, %arg0, %c0_i32_0, %c0_i32_1 : i32, i32, i32, i32
  }
}

</mosaic_0001>

<llo_original>
// kernel: bgcn_forward.1
$region0: #{bgcn_forward.1}
  #allocation0 [shape = 'u32[]', space=smem, size = 0x4, offset = 0x4, fixed_abs, tag = 'smem constant byte address 0x4 - core index']
  #allocation1 [shape = 'u32[144,128]{1,0:T(1,128)}', space=vmem, size = 0x12000, scoped, tag = 'internal scratch']
  %s0 = inlined_call_operand.vmem [shape: f32[2,16,128], index: 0, kind: input, shape index: {}]
  %s1 = inlined_call_operand.hbm [shape: bf16[16,16], index: 1, kind: input, shape index: {}]
  %s2 = inlined_call_operand.hbm [shape: bf16[16,16], index: 2, kind: input, shape index: {}]
  %s3 = inlined_call_operand.hbm [shape: bf16[3,16,16], index: 3, kind: input, shape index: {}]
  %s4 = inlined_call_operand.hbm [shape: bf16[3,16,16], index: 4, kind: input, shape index: {}]
  %s5 = inlined_call_operand.hbm [shape: bf16[128,128], index: 5, kind: input, shape index: {}]
  %s6 = inlined_call_operand.hbm [shape: bf16[3,128,128], index: 6, kind: input, shape index: {}]
  %s7 = inlined_call_operand.hbm [shape: bf16[128,128], index: 7, kind: input, shape index: {}]
  %s8 = inlined_call_operand.vmem [shape: bf16[2,128,128], index: 8, kind: input, shape index: {}]
  %s9 = inlined_call_operand.hbm [shape: bf16[2,128,128], index: 9, kind: input, shape index: {}]
  %s10 = inlined_call_operand.vmem [shape: f32[3,2,16,128], index: 10, kind: output, shape index: {}]
  %s11 = sld [smem:[#allocation0]]
  $region139: #{bgcn_forward.1} parent=0
    _
  %s13 = ssub.s32 1, %s11
  %s14 = scalar_select 0, %s13, %s11
  $region1: #{bgcn_forward.1} parent=0
    #allocation2 [shape = 'u8[4096]{0}', space=vmem, size = 0x1000, scoped, tag = 'input window, operand 1, single buffered']
    #allocation3 [shape = 's32[2]{0}', space=sflag, size = 0x8, scoped, tag = 'scoped memory for bgcn_forward.1']
    #allocation4 [shape = 'u8[4096]{0}', space=vmem, size = 0x1000, scoped, tag = 'input window, operand 2, single buffered']
    #allocation5 [shape = 's32[1]{0}', space=sflag, size = 0x4, scoped, tag = 'scoped memory for bgcn_forward.1']
    #allocation6 [shape = 'u8[12288]{0}', space=vmem, size = 0x3000, scoped, tag = 'input window, operand 3, single buffered']
    #allocation7 [shape = 'u8[12288]{0}', space=vmem, size = 0x3000, scoped, tag = 'input window, operand 4, single buffered']
    #allocation8 [shape = 's32[1]{0}', space=sflag, size = 0x4, scoped, tag = 'scoped memory for bgcn_forward.1']
    #allocation9 [shape = 'u8[32768]{0}', space=vmem, size = 0x8000, scoped, tag = 'input window, operand 5, single buffered']
    #allocation10 [shape = 'u8[98304]{0}', space=vmem, size = 0x18000, scoped, tag = 'input window, operand 6, single buffered']
    #allocation11 [shape = 's32[1]{0}', space=sflag, size = 0x4, scoped, tag = 'scoped memory for bgcn_forward.1']
    #allocation12 [shape = 'u8[32768]{0}', space=vmem, size = 0x8000, scoped, tag = 'input window, operand 7, single buffered']
    #allocation13 [shape = 'u8[65536]{0}', space=vmem, size = 0x10000, scoped, tag = 'input window, operand 9, single buffered']
    #allocation14 [shape = 's32[1]{0}', space=sflag, size = 0x4, scoped, tag = 'scoped memory for bgcn_forward.1']
    #allocation15 [shape = 'u8[49152]{0}', space=vmem, size = 0xc000, scoped, tag = 'output window, operand 0']
    %15 = vsyncpa [#allocation3], 0
    %16 = vsyncpa [#allocation5], 0
    %17 = vsyncpa [#allocation8], 0
    %18 = vsyncpa [#allocation11], 0
    %19 = vsyncpa [#allocation14], 0
    loop: start=0, step=1, limit=4
    $region2: #{bgcn_forward.1} parent=1 // loop_pre_header
      _
    $region3: #{bgcn_forward.1} parent=1 // loop_header
      %s21 = sphi 0, %s25
      %p22 = scmp.ge.s32.totalorder %s21, 4
      %s31 = sphi 0, %s33
      %s34 = sphi 0, %s31
      %s35 = sphi 0, %s34
      %s51 = sphi 0, %s35
      %s55 = sphi 0, %s55
      %s57 = sphi 0, %s55
      %s58 = sphi 0, %s57
      %s72 = sphi 0, %s58
      %s76 = sphi 0, %s76
      %s78 = sphi 0, %s76
      %s79 = sphi 0, %s78
      %s93 = sphi 0, %s79
      %s97 = sphi 0, %s97
      %s99 = sphi 0, %s97
      %s100 = sphi 0, %s99
      %s114 = sphi 0, %s100
      %s118 = sphi 0, %s118
      %s120 = sphi 0, %s118
      %s121 = sphi 0, %s120
      %s135 = sphi 0, %s121
      %s139 = sphi 0, %s139
      %s141 = sphi 0, %s139
      %s142 = sphi 0, %s141
      %s156 = sphi 0, %s142
      %s160 = sphi 0, %s160
      %s162 = sphi 0, %s160
      %s163 = sphi 0, %s162
      %s177 = sphi 0, %s163
      %s181 = sphi 0, %s181
      %s183 = sphi 0, %s181
      %s184 = sphi 0, %s183
      %s198 = sphi 0, %s184
      %s202 = sphi 0, %s202
      %s204 = sphi 0, %s202
      %s205 = sphi 0, %s204
      %s219 = sphi 0, %s205
      %s223 = sphi 0, %s223
      %s225 = sphi 0, %s223
      %s226 = sphi 0, %s225
      %s240 = sphi 0, %s226
      %s246 = sphi 0, %s248
      %s249 = sphi 0, %s246
      %s250 = sphi 0, %s249
      %s266 = sphi 0, %s250
    $region4: #{bgcn_forward.1} parent=1 // loop_header_branch
      %24 = sbr.rel (%p22) target = $region8
    $region5: #{bgcn_forward.1} parent=1 // loop_body
      %s26 = ssub.s32 %s21, 1
      %s27 = ssub.s32 %s21, 2
      %s28 = sadd.s32 %s21, 1
      %s29 = ssub.s32 %s21, %s28
      %p30 = scmp.eq.s32.totalorder %s29, 0
      %s32 = sadd.s32 %s31, 1
      %s33 = scalar_select %p30, %s31, %s32
      %p36 = pneg %p30
      %p37 = scmp.eq.s32.totalorder %s21, 1
      %p38 = por %p36, %p37
      %p39 = scmp.ne.s32.totalorder %s31, %s34
      %p40 = scmp.eq.s32.totalorder %s21, 0
      %p41 = por %p39, %p40
      %p42 = scmp.ne.s32.totalorder %s31, %s34
      %p43 = scmp.eq.s32.totalorder %s26, 1
      %p44 = por %p42, %p43
      %p45 = scmp.ne.s32.totalorder %s34, %s35
      %p46 = scmp.eq.s32.totalorder %s26, 0
      %p47 = por %p45, %p46
      %p48 = scmp.ne.s32.totalorder %s34, %s35
      %p49 = scmp.eq.s32.totalorder %s27, 1
      %p50 = por %p48, %p49
      %p52 = scmp.ne.s32.totalorder %s35, %s51
      %p53 = scmp.eq.s32.totalorder %s27, 0
      %p54 = por %p52, %p53
      %s56 = sadd.s32 %s55, 1
      %p59 = scmp.eq.s32.totalorder %s21, 1
      %p60 = scmp.ne.s32.totalorder %s55, %s57
      %p61 = scmp.eq.s32.totalorder %s21, 0
      %p62 = por %p60, %p61
      %p63 = scmp.ne.s32.totalorder %s55, %s57
      %p64 = scmp.eq.s32.totalorder %s26, 1
      %p65 = por %p63, %p64
      %p66 = scmp.ne.s32.totalorder %s57, %s58
      %p67 = scmp.eq.s32.totalorder %s26, 0
      %p68 = por %p66, %p67
      %p69 = scmp.ne.s32.totalorder %s57, %s58
      %p70 = scmp.eq.s32.totalorder %s27, 1
      %p71 = por %p69, %p70
      %p73 = scmp.ne.s32.totalorder %s58, %s72
      %p74 = scmp.eq.s32.totalorder %s27, 0
      %p75 = por %p73, %p74
      %s77 = sadd.s32 %s76, 1
      %p80 = scmp.eq.s32.totalorder %s21, 1
      %p81 = scmp.ne.s32.totalorder %s76, %s78
      %p82 = scmp.eq.s32.totalorder %s21, 0
      %p83 = por %p81, %p82
      %p84 = scmp.ne.s32.totalorder %s76, %s78
      %p85 = scmp.eq.s32.totalorder %s26, 1
      %p86 = por %p84, %p85
      %p87 = scmp.ne.s32.totalorder %s78, %s79
      %p88 = scmp.eq.s32.totalorder %s26, 0
      %p89 = por %p87, %p88
      %p90 = scmp.ne.s32.totalorder %s78, %s79
      %p91 = scmp.eq.s32.totalorder %s27, 1
      %p92 = por %p90, %p91
      %p94 = scmp.ne.s32.totalorder %s79, %s93
      %p95 = scmp.eq.s32.totalorder %s27, 0
      %p96 = por %p94, %p95
      %s98 = sadd.s32 %s97, 1
      %p101 = scmp.eq.s32.totalorder %s21, 1
      %p102 = scmp.ne.s32.totalorder %s97, %s99
      %p103 = scmp.eq.s32.totalorder %s21, 0
      %p104 = por %p102, %p103
      %p105 = scmp.ne.s32.totalorder %s97, %s99
      %p106 = scmp.eq.s32.totalorder %s26, 1
      %p107 = por %p105, %p106
      %p108 = scmp.ne.s32.totalorder %s99, %s100
      %p109 = scmp.eq.s32.totalorder %s26, 0
      %p110 = por %p108, %p109
      %p111 = scmp.ne.s32.totalorder %s99, %s100
      %p112 = scmp.eq.s32.totalorder %s27, 1
      %p113 = por %p111, %p112
      %p115 = scmp.ne.s32.totalorder %s100, %s114
      %p116 = scmp.eq.s32.totalorder %s27, 0
      %p117 = por %p115, %p116
      %s119 = sadd.s32 %s118, 1
      %p122 = scmp.eq.s32.totalorder %s21, 1
      %p123 = scmp.ne.s32.totalorder %s118, %s120
      %p124 = scmp.eq.s32.totalorder %s21, 0
      %p125 = por %p123, %p124
      %p126 = scmp.ne.s32.totalorder %s118, %s120
      %p127 = scmp.eq.s32.totalorder %s26, 1
      %p128 = por %p126, %p127
      %p129 = scmp.ne.s32.totalorder %s120, %s121
      %p130 = scmp.eq.s32.totalorder %s26, 0
      %p131 = por %p129, %p130
      %p132 = scmp.ne.s32.totalorder %s120, %s121
      %p133 = scmp.eq.s32.totalorder %s27, 1
      %p134 = por %p132, %p133
      %p136 = scmp.ne.s32.totalorder %s121, %s135
      %p137 = scmp.eq.s32.totalorder %s27, 0
      %p138 = por %p136, %p137
      %s140 = sadd.s32 %s139, 1
      %p143 = scmp.eq.s32.totalorder %s21, 1
      %p144 = scmp.ne.s32.totalorder %s139, %s141
      %p145 = scmp.eq.s32.totalorder %s21, 0
      %p146 = por %p144, %p145
      %p147 = scmp.ne.s32.totalorder %s139, %s141
      %p148 = scmp.eq.s32.totalorder %s26, 1
      %p149 = por %p147, %p148
      %p150 = scmp.ne.s32.totalorder %s141, %s142
      %p151 = scmp.eq.s32.totalorder %s26, 0
      %p152 = por %p150, %p151
      %p153 = scmp.ne.s32.totalorder %s141, %s142
      %p154 = scmp.eq.s32.totalorder %s27, 1
      %p155 = por %p153, %p154
      %p157 = scmp.ne.s32.totalorder %s142, %s156
      %p158 = scmp.eq.s32.totalorder %s27, 0
      %p159 = por %p157, %p158
      %s161 = sadd.s32 %s160, 1
      %p164 = scmp.eq.s32.totalorder %s21, 1
      %p165 = scmp.ne.s32.totalorder %s160, %s162
      %p166 = scmp.eq.s32.totalorder %s21, 0
      %p167 = por %p165, %p166
      %p168 = scmp.ne.s32.totalorder %s160, %s162
      %p169 = scmp.eq.s32.totalorder %s26, 1
      %p170 = por %p168, %p169
      %p171 = scmp.ne.s32.totalorder %s162, %s163
      %p172 = scmp.eq.s32.totalorder %s26, 0
      %p173 = por %p171, %p172
      %p174 = scmp.ne.s32.totalorder %s162, %s163
      %p175 = scmp.eq.s32.totalorder %s27, 1
      %p176 = por %p174, %p175
      %p178 = scmp.ne.s32.totalorder %s163, %s177
      %p179 = scmp.eq.s32.totalorder %s27, 0
      %p180 = por %p178, %p179
      %s182 = sadd.s32 %s181, 1
      %p185 = scmp.eq.s32.totalorder %s21, 1
      %p186 = scmp.ne.s32.totalorder %s181, %s183
      %p187 = scmp.eq.s32.totalorder %s21, 0
      %p188 = por %p186, %p187
      %p189 = scmp.ne.s32.totalorder %s181, %s183
      %p190 = scmp.eq.s32.totalorder %s26, 1
      %p191 = por %p189, %p190
      %p192 = scmp.ne.s32.totalorder %s183, %s184
      %p193 = scmp.eq.s32.totalorder %s26, 0
      %p194 = por %p192, %p193
      %p195 = scmp.ne.s32.totalorder %s183, %s184
      %p196 = scmp.eq.s32.totalorder %s27, 1
      %p197 = por %p195, %p196
      %p199 = scmp.ne.s32.totalorder %s184, %s198
      %p200 = scmp.eq.s32.totalorder %s27, 0
      %p201 = por %p199, %p200
      %s203 = sadd.s32 %s202, 1
      %p206 = scmp.eq.s32.totalorder %s21, 1
      %p207 = scmp.ne.s32.totalorder %s202, %s204
      %p208 = scmp.eq.s32.totalorder %s21, 0
      %p209 = por %p207, %p208
      %p210 = scmp.ne.s32.totalorder %s202, %s204
      %p211 = scmp.eq.s32.totalorder %s26, 1
      %p212 = por %p210, %p211
      %p213 = scmp.ne.s32.totalorder %s204, %s205
      %p214 = scmp.eq.s32.totalorder %s26, 0
      %p215 = por %p213, %p214
      %p216 = scmp.ne.s32.totalorder %s204, %s205
      %p217 = scmp.eq.s32.totalorder %s27, 1
      %p218 = por %p216, %p217
      %p220 = scmp.ne.s32.totalorder %s205, %s219
      %p221 = scmp.eq.s32.totalorder %s27, 0
      %p222 = por %p220, %p221
      %s224 = sadd.s32 %s223, 1
      %p227 = scmp.eq.s32.totalorder %s21, 1
      %p228 = scmp.ne.s32.totalorder %s223, %s225
      %p229 = scmp.eq.s32.totalorder %s21, 0
      %p230 = por %p228, %p229
      %p231 = scmp.ne.s32.totalorder %s223, %s225
      %p232 = scmp.eq.s32.totalorder %s26, 1
      %p233 = por %p231, %p232
      %p234 = scmp.ne.s32.totalorder %s225, %s226
      %p235 = scmp.eq.s32.totalorder %s26, 0
      %p236 = por %p234, %p235
      %p237 = scmp.ne.s32.totalorder %s225, %s226
      %p238 = scmp.eq.s32.totalorder %s27, 1
      %p239 = por %p237, %p238
      %p241 = scmp.ne.s32.totalorder %s226, %s240
      %p242 = scmp.eq.s32.totalorder %s27, 0
      %p243 = por %p241, %p242
      %s244 = ssub.s32 %s21, %s28
      %p245 = scmp.eq.s32.totalorder %s244, 0
      %s247 = sadd.s32 %s246, 1
      %s248 = scalar_select %p245, %s246, %s247
      %p251 = pneg %p245
      %p252 = scmp.eq.s32.totalorder %s21, 1
      %p253 = por %p251, %p252
      %p254 = scmp.ne.s32.totalorder %s246, %s249
      %p255 = scmp.eq.s32.totalorder %s21, 0
      %p256 = por %p254, %p255
      %p257 = scmp.ne.s32.totalorder %s246, %s249
      %p258 = scmp.eq.s32.totalorder %s26, 1
      %p259 = por %p257, %p258
      %p260 = scmp.ne.s32.totalorder %s249, %s250
      %p261 = scmp.eq.s32.totalorder %s26, 0
      %p262 = por %p260, %p261
      %p263 = scmp.ne.s32.totalorder %s249, %s250
      %p264 = scmp.eq.s32.totalorder %s27, 1
      %p265 = por %p263, %p264
      %p267 = scmp.ne.s32.totalorder %s250, %s266
      %p268 = scmp.eq.s32.totalorder %s27, 0
      %p269 = por %p267, %p268
      %p270 = scmp.le.s32.totalorder 1, %s21
      %p271 = scmp.lt.s32.totalorder %s21, 3
      %p272 = pnand %p270, %p271
      %p273 = pneg %p272
      // Predicated region
      $region9: #{bgcn_forward.1} parent=5 // pred_check
        _
      $region10: #{bgcn_forward.1} parent=5 // pred_check_branch
        %275 = sbr.rel (%p272) target = $region12
      $region11: #{bgcn_forward.1} parent=5 // pred_region
        %s276 = ssub.s32 %s21, 1
        // Predicated region
        $region13: #{bgcn_forward.1} parent=11 // pred_check
          %p277 = pneg %p68
        $region14: #{bgcn_forward.1} parent=11 // pred_check_branch
          %279 = sbr.rel (%p277) target = $region16
        $region15: #{bgcn_forward.1} parent=11 // pred_region
          %s281 = ssub.s32 128, 128
          %282 = vsyncadd [#allocation3], %s281
          %s283 = sshll.u32 [#allocation2], 4
          %s284 = int_to_ptr.vmem [resolvable:$true] %s283
          %289 = dma.hbm_to_vmem [thread:$0]  %s1, 128, %s284, [#allocation3], 64, 64, 4
        $region16: #{bgcn_forward.1} parent=11 // pred_fallthru
          _
        // Predicated region
        $region17: #{bgcn_forward.1} parent=11 // pred_check
          %p290 = pneg %p89
        $region18: #{bgcn_forward.1} parent=11 // pred_check_branch
          %292 = sbr.rel (%p290) target = $region20
        $region19: #{bgcn_forward.1} parent=11 // pred_region
          %s294 = ssub.s32 128, 128
          %295 = vsyncadd [#allocation5], %s294
          %s296 = sshll.u32 [#allocation4], 4
          %s297 = int_to_ptr.vmem [resolvable:$true] %s296
          %302 = dma.hbm_to_vmem [thread:$0]  %s2, 128, %s297, [#allocation5], 64, 64, 4
        $region20: #{bgcn_forward.1} parent=11 // pred_fallthru
          _
        // Predicated region
        $region21: #{bgcn_forward.1} parent=11 // pred_check
          %p303 = pneg %p110
        $region22: #{bgcn_forward.1} parent=11 // pred_check_branch
          %305 = sbr.rel (%p303) target = $region24
        $region23: #{bgcn_forward.1} parent=11 // pred_region
          %s307 = ssub.s32 384, 384
          %308 = vsyncadd [#allocation5], %s307
          %s309 = sshll.u32 [#allocation6], 4
          %s310 = int_to_ptr.vmem [resolvable:$true] %s309
          %315 = dma.hbm_to_vmem [thread:$0]  %s3, 384, %s310, [#allocation5], 64, 64, 4
        $region24: #{bgcn_forward.1} parent=11 // pred_fallthru
          _
        // Predicated region
        $region25: #{bgcn_forward.1} parent=11 // pred_check
          %p316 = pneg %p131
        $region26: #{bgcn_forward.1} parent=11 // pred_check_branch
          %318 = sbr.rel (%p316) target = $region28
        $region27: #{bgcn_forward.1} parent=11 // pred_region
          %s320 = ssub.s32 384, 384
          %321 = vsyncadd [#allocation8], %s320
          %s322 = sshll.u32 [#allocation7], 4
          %s323 = int_to_ptr.vmem [resolvable:$true] %s322
          %328 = dma.hbm_to_vmem [thread:$0]  %s4, 384, %s323, [#allocation8], 64, 64, 4
        $region28: #{bgcn_forward.1} parent=11 // pred_fallthru
          _
        // Predicated region
        $region29: #{bgcn_forward.1} parent=11 // pred_check
          %p329 = pneg %p152
        $region30: #{bgcn_forward.1} parent=11 // pred_check_branch
          %331 = sbr.rel (%p329) target = $region32
        $region31: #{bgcn_forward.1} parent=11 // pred_region
          %s333 = ssub.s32 1024, 1024
          %334 = vsyncadd [#allocation8], %s333
          %s335 = sshll.u32 [#allocation9], 4
          %s336 = int_to_ptr.vmem [resolvable:$true] %s335
          %341 = dma.hbm_to_vmem [thread:$0]  %s5, 1024, %s336, [#allocation8], 64, 64, 4
        $region32: #{bgcn_forward.1} parent=11 // pred_fallthru
          _
        // Predicated region
        $region33: #{bgcn_forward.1} parent=11 // pred_check
          %p342 = pneg %p173
        $region34: #{bgcn_forward.1} parent=11 // pred_check_branch
          %344 = sbr.rel (%p342) target = $region36
        $region35: #{bgcn_forward.1} parent=11 // pred_region
          %s346 = ssub.s32 3072, 3072
          %347 = vsyncadd [#allocation11], %s346
          %s348 = sshll.u32 [#allocation10], 4
          %s349 = int_to_ptr.vmem [resolvable:$true] %s348
          %354 = dma.hbm_to_vmem [thread:$0]  %s6, 3072, %s349, [#allocation11], 64, 64, 4
        $region36: #{bgcn_forward.1} parent=11 // pred_fallthru
          _
        // Predicated region
        $region37: #{bgcn_forward.1} parent=11 // pred_check
          %p355 = pneg %p194
        $region38: #{bgcn_forward.1} parent=11 // pred_check_branch
          %357 = sbr.rel (%p355) target = $region40
        $region39: #{bgcn_forward.1} parent=11 // pred_region
          %s359 = ssub.s32 1024, 1024
          %360 = vsyncadd [#allocation11], %s359
          %s361 = sshll.u32 [#allocation12], 4
          %s362 = int_to_ptr.vmem [resolvable:$true] %s361
          %367 = dma.hbm_to_vmem [thread:$0]  %s7, 1024, %s362, [#allocation11], 64, 64, 4
        $region40: #{bgcn_forward.1} parent=11 // pred_fallthru
          _
        // Predicated region
        $region41: #{bgcn_forward.1} parent=11 // pred_check
          %p368 = pneg %p215
        $region42: #{bgcn_forward.1} parent=11 // pred_check_branch
          %370 = sbr.rel (%p368) target = $region44
        $region43: #{bgcn_forward.1} parent=11 // pred_region
          _
        $region44: #{bgcn_forward.1} parent=11 // pred_fallthru
          _
        // Predicated region
        $region45: #{bgcn_forward.1} parent=11 // pred_check
          %p371 = pneg %p236
        $region46: #{bgcn_forward.1} parent=11 // pred_check_branch
          %373 = sbr.rel (%p371) target = $region48
        $region47: #{bgcn_forward.1} parent=11 // pred_region
          %s375 = ssub.s32 2048, 2048
          %376 = vsyncadd [#allocation14], %s375
          %s377 = sshll.u32 [#allocation13], 4
          %s378 = int_to_ptr.vmem [resolvable:$true] %s377
          %383 = dma.hbm_to_vmem [thread:$0]  %s9, 2048, %s378, [#allocation14], 64, 64, 4
        $region48: #{bgcn_forward.1} parent=11 // pred_fallthru
          _
      $region12: #{bgcn_forward.1} parent=5 // pred_fallthru
        _
      %p384 = scmp.lt.s32.totalorder %s21, 2
      // Predicated region
      $region49: #{bgcn_forward.1} parent=5 // pred_check
        %p385 = pneg %p384
      $region50: #{bgcn_forward.1} parent=5 // pred_check_branch
        %387 = sbr.rel (%p385) target = $region52
      $region51: #{bgcn_forward.1} parent=5 // pred_region
        // Predicated region
        $region53: #{bgcn_forward.1} parent=51 // pred_check
          %p388 = pneg %p41
        $region54: #{bgcn_forward.1} parent=51 // pred_check_branch
          %390 = sbr.rel (%p388) target = $region56
        $region55: #{bgcn_forward.1} parent=51 // pred_region
          %p391 = scmp.lt.s32.totalorder %s21, 1
          %s392 = scalar_select %p391, %s21, 1
          %s393 = smul.addr %s392, 2
          %s394 = smul.addr %s393, 8
          %s395 = scalar_lea.vmem %s0, %s394
        $region56: #{bgcn_forward.1} parent=51 // pred_fallthru
          _
      $region52: #{bgcn_forward.1} parent=5 // pred_fallthru
        _
      %p396 = scmp.le.s32.totalorder 1, %s21
      %p397 = scmp.lt.s32.totalorder %s21, 3
      %p398 = pnand %p396, %p397
      %p399 = pneg %p398
      // Predicated region
      $region57: #{bgcn_forward.1} parent=5 // pred_check
        _
      $region58: #{bgcn_forward.1} parent=5 // pred_check_branch
        %401 = sbr.rel (%p398) target = $region60
      $region59: #{bgcn_forward.1} parent=5 // pred_region
        %s402 = ssub.s32 %s21, 1
        // Predicated region
        $region61: #{bgcn_forward.1} parent=59 // pred_check
          %p403 = pneg %p68
        $region62: #{bgcn_forward.1} parent=59 // pred_check_branch
          %405 = sbr.rel (%p403) target = $region64
        $region63: #{bgcn_forward.1} parent=59 // pred_region
          %406 = dma.done [#allocation3], 128
        $region64: #{bgcn_forward.1} parent=59 // pred_fallthru
          _
        // Predicated region
        $region65: #{bgcn_forward.1} parent=59 // pred_check
          %p407 = pneg %p89
        $region66: #{bgcn_forward.1} parent=59 // pred_check_branch
          %409 = sbr.rel (%p407) target = $region68
        $region67: #{bgcn_forward.1} parent=59 // pred_region
          %410 = dma.done [#allocation5], 128
        $region68: #{bgcn_forward.1} parent=59 // pred_fallthru
          _
        // Predicated region
        $region69: #{bgcn_forward.1} parent=59 // pred_check
          %p411 = pneg %p110
        $region70: #{bgcn_forward.1} parent=59 // pred_check_branch
          %413 = sbr.rel (%p411) target = $region72
        $region71: #{bgcn_forward.1} parent=59 // pred_region
          %414 = dma.done [#allocation5], 384
        $region72: #{bgcn_forward.1} parent=59 // pred_fallthru
          _
        // Predicated region
        $region73: #{bgcn_forward.1} parent=59 // pred_check
          %p415 = pneg %p131
        $region74: #{bgcn_forward.1} parent=59 // pred_check_branch
          %417 = sbr.rel (%p415) target = $region76
        $region75: #{bgcn_forward.1} parent=59 // pred_region
          %418 = dma.done [#allocation8], 384
        $region76: #{bgcn_forward.1} parent=59 // pred_fallthru
          _
        // Predicated region
        $region77: #{bgcn_forward.1} parent=59 // pred_check
          %p419 = pneg %p152
        $region78: #{bgcn_forward.1} parent=59 // pred_check_branch
          %421 = sbr.rel (%p419) target = $region80
        $region79: #{bgcn_forward.1} parent=59 // pred_region
          %422 = dma.done [#allocation8], 1024
        $region80: #{bgcn_forward.1} parent=59 // pred_fallthru
          _
        // Predicated region
        $region81: #{bgcn_forward.1} parent=59 // pred_check
          %p423 = pneg %p173
        $region82: #{bgcn_forward.1} parent=59 // pred_check_branch
          %425 = sbr.rel (%p423) target = $region84
        $region83: #{bgcn_forward.1} parent=59 // pred_region
          %426 = dma.done [#allocation11], 3072
        $region84: #{bgcn_forward.1} parent=59 // pred_fallthru
          _
        // Predicated region
        $region85: #{bgcn_forward.1} parent=59 // pred_check
          %p427 = pneg %p194
        $region86: #{bgcn_forward.1} parent=59 // pred_check_branch
          %429 = sbr.rel (%p427) target = $region88
        $region87: #{bgcn_forward.1} parent=59 // pred_region
          %430 = dma.done [#allocation11], 1024
        $region88: #{bgcn_forward.1} parent=59 // pred_fallthru
          _
        // Predicated region
        $region89: #{bgcn_forward.1} parent=59 // pred_check
          %p431 = pneg %p236
        $region90: #{bgcn_forward.1} parent=59 // pred_check_branch
          %433 = sbr.rel (%p431) target = $region92
        $region91: #{bgcn_forward.1} parent=59 // pred_region
          %434 = dma.done [#allocation14], 2048
        $region92: #{bgcn_forward.1} parent=59 // pred_fallthru
          _
        %p435 = scmp.lt.s32.totalorder %s26, 1
        %s436 = scalar_select %p435, %s26, 1
        %s437 = smul.addr %s436, 2
        %s438 = smul.addr %s437, 8
        %s439 = scalar_lea.vmem %s0, %s438
        %p440 = pneg %p47
        %p441 = pneg %p44
        %p442 = pneg %p68
        %p443 = pneg %p65
        %p444 = pneg %p89
        %p445 = pneg %p86
        %p446 = pneg %p110
        %p447 = pneg %p107
        %p448 = pneg %p131
        %p449 = pneg %p128
        %p450 = pneg %p152
        %p451 = pneg %p149
        %p452 = pneg %p173
        %p453 = pneg %p170
        %p454 = pneg %p194
        %p455 = pneg %p191
        %p456 = pneg %p215
        %p457 = pneg %p212
        %p458 = pneg %p236
        %p459 = pneg %p233
        %p460 = pneg %p262
        %p461 = pneg %p259
        %s462 = sand.u32 %s249, 1
        %s463 = sand.u32 %s249, 1
        %s464 = smul.addr %s463, 48
        %s465 = scalar_lea.vmem [#allocation15], %s464
        %p466 = scmp.lt.s32.totalorder %s26, 1
        %s467 = scalar_select %p466, %s26, 1
        %s468 = smul.addr %s467, 2
        %s469 = smul.addr %s468, 8
        %s470 = scalar_lea.vmem %s0, %s469
        %v472 = vld [vmem:[%s470] sm:$0xff]
        %v473 = vld [vmem:[%s470 + $0x8] sm:$0xff]
        %v474 = vld [vmem:[#allocation2] sm:$0xf]
        %v475 = vld [vmem:[#allocation2 + $0x4] sm:$0xf]
        %v476 = vld [vmem:[#allocation4] sm:$0xf]
        %v477 = vld [vmem:[#allocation4 + $0x4] sm:$0xf]
        %v478 = vpack.c.bf16 %v473, %v472
        %v481 = vunpack.c.l.b16 %v474
        %v482 = vunpack.c.l.b16 %v475
        %v483 = vpack.c.b16 %v482, %v481
        %vm484 = vcmask 130048
        %v486 = vsel %vm484, %v483, 0
        %488 = vmatprep.subr.bf16.mxu0 0
        %489 = vmatpush1.bf16.msra.mxu0 %v478
        %490 = vmatprep.subr.bf16.mxu0 0
        %491 = vmatpush1.bf16.msra.mxu0 0
        %492 = vmatprep.subr.bf16.mxu0 0
        %493 = vmatpush1.bf16.msra.mxu0 0
        %494 = vmatprep.subr.bf16.mxu0 0
        %495 = vmatpush1.bf16.msra.mxu0 0
        %496 = vmatprep.subr.bf16.mxu0 0
        %497 = vmatpush1.bf16.msra.mxu0 0
        %498 = vmatprep.subr.bf16.mxu0 0
        %499 = vmatpush1.bf16.msra.mxu0 0
        %500 = vmatprep.subr.bf16.mxu0 0
        %501 = vmatpush1.bf16.msra.mxu0 0
        %502 = vmatprep.subr.bf16.mxu0 0
        %503 = vmatpush1.bf16.msra.mxu0 0
        %504 = vmatprep.subr.bf16.mxu0 0
        %505 = vmatpush1.bf16.msra.mxu0 0
        %506 = vmatprep.subr.bf16.mxu0 0
        %507 = vmatpush1.bf16.msra.mxu0 0
        %508 = vmatprep.subr.bf16.mxu0 0
        %509 = vmatpush1.bf16.msra.mxu0 0
        %510 = vmatprep.subr.bf16.mxu0 0
        %511 = vmatpush1.bf16.msra.mxu0 0
        %512 = vmatprep.subr.bf16.mxu0 0
        %513 = vmatpush1.bf16.msra.mxu0 0
        %514 = vmatprep.subr.bf16.mxu0 0
        %515 = vmatpush1.bf16.msra.mxu0 0
        %516 = vmatprep.subr.bf16.mxu0 0
        %517 = vmatpush1.bf16.msra.mxu0 0
        %518 = vmatprep.subr.bf16.mxu0 0
        %519 = vmatpush1.bf16.msra.mxu0 0
        %520 = vmatprep.mubr.bf16.mxu0 0
        %521 = vmatmul.mubr.bf16.gmra.mrb[0].mxu0 %v486
        %v522 = vpop.f32.mrb[0].mxu0
        %v523 = vadd.f32 0.0, %v522
        %v524 = vpop.f32.mrb[0].mxu0
        %v525 = vpop.f32.mrb[0].mxu0
        %v526 = vadd.f32 0.0, %v525
        %v527 = vpop.f32.mrb[0].mxu0
        %528 = vdwg.mxu0
        %v529 = vld [vmem:[#allocation9] sm:$0xf]
        %v530 = vld [vmem:[#allocation9 + $0x4] sm:$0xf]
        %v531 = vld [vmem:[#allocation9 + $0x8] sm:$0xf]
        %v532 = vld [vmem:[#allocation9 + $0xc] sm:$0xf]
        %v533 = vld [vmem:[#allocation9 + $0x10] sm:$0xf]
        %v534 = vld [vmem:[#allocation9 + $0x14] sm:$0xf]
        %v535 = vld [vmem:[#allocation9 + $0x18] sm:$0xf]
        %v536 = vld [vmem:[#allocation9 + $0x1c] sm:$0xf]
        %v537 = vld [vmem:[#allocation9 + $0x20] sm:$0xf]
        %v538 = vld [vmem:[#allocation9 + $0x24] sm:$0xf]
        %v539 = vld [vmem:[#allocation9 + $0x28] sm:$0xf]
        %v540 = vld [vmem:[#allocation9 + $0x2c] sm:$0xf]
        %v541 = vld [vmem:[#allocation9 + $0x30] sm:$0xf]
        %v542 = vld [vmem:[#allocation9 + $0x34] sm:$0xf]
        %v543 = vld [vmem:[#allocation9 + $0x38] sm:$0xf]
        %v544 = vld [vmem:[#allocation9 + $0x3c] sm:$0xf]
        %v545 = vpack.c.bf16 %v526, %v523
        %v562 = vunpack.c.l.b16 %v529
        %v563 = vunpack.c.l.b16 %v530
        %v564 = vunpack.c.l.b16 %v531
        %v565 = vunpack.c.l.b16 %v532
        %v566 = vunpack.c.l.b16 %v533
        %v567 = vunpack.c.l.b16 %v534
        %v568 = vunpack.c.l.b16 %v535
        %v569 = vunpack.c.l.b16 %v536
        %v570 = vunpack.c.l.b16 %v537
        %v571 = vunpack.c.l.b16 %v538
        %v572 = vunpack.c.l.b16 %v539
        %v573 = vunpack.c.l.b16 %v540
        %v574 = vunpack.c.l.b16 %v541
        %v575 = vunpack.c.l.b16 %v542
        %v576 = vunpack.c.l.b16 %v543
        %v577 = vunpack.c.l.b16 %v544
        %v578 = vpack.c.b16 %v563, %v562
        %v579 = vpack.c.b16 %v565, %v564
        %v580 = vpack.c.b16 %v567, %v566
        %v581 = vpack.c.b16 %v569, %v568
        %v582 = vpack.c.b16 %v571, %v570
        %v583 = vpack.c.b16 %v573, %v572
        %v584 = vpack.c.b16 %v575, %v574
        %v585 = vpack.c.b16 %v577, %v576
        %594 = vmatprep.subr.bf16.mxu0 0
        %595 = vmatpush1.bf16.msra.mxu0 %v578
        %596 = vmatprep.subr.bf16.mxu0 0
        %597 = vmatpush1.bf16.msra.mxu0 %v579
        %598 = vmatprep.subr.bf16.mxu0 0
        %599 = vmatpush1.bf16.msra.mxu0 %v580
        %600 = vmatprep.subr.bf16.mxu0 0
        %601 = vmatpush1.bf16.msra.mxu0 %v581
        %602 = vmatprep.subr.bf16.mxu0 0
        %603 = vmatpush1.bf16.msra.mxu0 %v582
        %604 = vmatprep.subr.bf16.mxu0 0
        %605 = vmatpush1.bf16.msra.mxu0 %v583
        %606 = vmatprep.subr.bf16.mxu0 0
        %607 = vmatpush1.bf16.msra.mxu0 %v584
        %608 = vmatprep.subr.bf16.mxu0 0
        %609 = vmatpush1.bf16.msra.mxu0 %v585
        %610 = vmatprep.subr.bf16.mxu0 0
        %611 = vmatpush1.bf16.msra.mxu0 0
        %612 = vmatprep.subr.bf16.mxu0 0
        %613 = vmatpush1.bf16.msra.mxu0 0
        %614 = vmatprep.subr.bf16.mxu0 0
        %615 = vmatpush1.bf16.msra.mxu0 0
        %616 = vmatprep.subr.bf16.mxu0 0
        %617 = vmatpush1.bf16.msra.mxu0 0
        %618 = vmatprep.subr.bf16.mxu0 0
        %619 = vmatpush1.bf16.msra.mxu0 0
        %620 = vmatprep.subr.bf16.mxu0 0
        %621 = vmatpush1.bf16.msra.mxu0 0
        %622 = vmatprep.subr.bf16.mxu0 0
        %623 = vmatpush1.bf16.msra.mxu0 0
        %624 = vmatprep.subr.bf16.mxu0 0
        %625 = vmatpush1.bf16.msra.mxu0 0
        %626 = vmatprep.mubr.bf16.mxu0 0
        %627 = vmatmul.mubr.bf16.gmra.mrb[0].mxu0 %v545
        %v628 = vpop.f32.mrb[0].mxu0
        %v629 = vadd.f32 0.0, %v628
        %v630 = vpop.f32.mrb[0].mxu0
        %v631 = vpop.f32.mrb[0].mxu0
        %v632 = vadd.f32 0.0, %v631
        %v633 = vpop.f32.mrb[0].mxu0
        %634 = vdwg.mxu0
        %v635 = vld [vmem:[#allocation7] sm:$0xf]
        %v636 = vld [vmem:[#allocation7 + $0x4] sm:$0xf]
        %v637 = vld [vmem:[#allocation10] sm:$0xf]
        %v638 = vld [vmem:[#allocation10 + $0x4] sm:$0xf]
        %v639 = vld [vmem:[#allocation10 + $0x8] sm:$0xf]
        %v640 = vld [vmem:[#allocation10 + $0xc] sm:$0xf]
        %v641 = vld [vmem:[#allocation10 + $0x10] sm:$0xf]
        %v642 = vld [vmem:[#allocation10 + $0x14] sm:$0xf]
        %v643 = vld [vmem:[#allocation10 + $0x18] sm:$0xf]
        %v644 = vld [vmem:[#allocation10 + $0x1c] sm:$0xf]
        %v645 = vld [vmem:[#allocation10 + $0x20] sm:$0xf]
        %v646 = vld [vmem:[#allocation10 + $0x24] sm:$0xf]
        %v647 = vld [vmem:[#allocation10 + $0x28] sm:$0xf]
        %v648 = vld [vmem:[#allocation10 + $0x2c] sm:$0xf]
        %v649 = vld [vmem:[#allocation10 + $0x30] sm:$0xf]
        %v650 = vld [vmem:[#allocation10 + $0x34] sm:$0xf]
        %v651 = vld [vmem:[#allocation10 + $0x38] sm:$0xf]
        %v652 = vld [vmem:[#allocation10 + $0x3c] sm:$0xf]
        %v653 = vpack.c.bf16 %v632, %v629
        %v670 = vunpack.c.l.b16 %v637
        %v671 = vunpack.c.l.b16 %v638
        %v672 = vunpack.c.l.b16 %v639
        %v673 = vunpack.c.l.b16 %v640
        %v674 = vunpack.c.l.b16 %v641
        %v675 = vunpack.c.l.b16 %v642
        %v676 = vunpack.c.l.b16 %v643
        %v677 = vunpack.c.l.b16 %v644
        %v678 = vunpack.c.l.b16 %v645
        %v679 = vunpack.c.l.b16 %v646
        %v680 = vunpack.c.l.b16 %v647
        %v681 = vunpack.c.l.b16 %v648
        %v682 = vunpack.c.l.b16 %v649
        %v683 = vunpack.c.l.b16 %v650
        %v684 = vunpack.c.l.b16 %v651
        %v685 = vunpack.c.l.b16 %v652
        %v686 = vpack.c.b16 %v671, %v670
        %v687 = vpack.c.b16 %v673, %v672
        %v688 = vpack.c.b16 %v675, %v674
        %v689 = vpack.c.b16 %v677, %v676
        %v690 = vpack.c.b16 %v679, %v678
        %v691 = vpack.c.b16 %v681, %v680
        %v692 = vpack.c.b16 %v683, %v682
        %v693 = vpack.c.b16 %v685, %v684
        %702 = vmatprep.subr.bf16.mxu0 0
        %703 = vmatpush1.bf16.msra.mxu0 %v686
        %704 = vmatprep.subr.bf16.mxu0 0
        %705 = vmatpush1.bf16.msra.mxu0 %v687
        %706 = vmatprep.subr.bf16.mxu0 0
        %707 = vmatpush1.bf16.msra.mxu0 %v688
        %708 = vmatprep.subr.bf16.mxu0 0
        %709 = vmatpush1.bf16.msra.mxu0 %v689
        %710 = vmatprep.subr.bf16.mxu0 0
        %711 = vmatpush1.bf16.msra.mxu0 %v690
        %712 = vmatprep.subr.bf16.mxu0 0
        %713 = vmatpush1.bf16.msra.mxu0 %v691
        %714 = vmatprep.subr.bf16.mxu0 0
        %715 = vmatpush1.bf16.msra.mxu0 %v692
        %716 = vmatprep.subr.bf16.mxu0 0
        %717 = vmatpush1.bf16.msra.mxu0 %v693
        %718 = vmatprep.subr.bf16.mxu0 0
        %719 = vmatpush1.bf16.msra.mxu0 0
        %720 = vmatprep.subr.bf16.mxu0 0
        %721 = vmatpush1.bf16.msra.mxu0 0
        %722 = vmatprep.subr.bf16.mxu0 0
        %723 = vmatpush1.bf16.msra.mxu0 0
        %724 = vmatprep.subr.bf16.mxu0 0
        %725 = vmatpush1.bf16.msra.mxu0 0
        %726 = vmatprep.subr.bf16.mxu0 0
        %727 = vmatpush1.bf16.msra.mxu0 0
        %728 = vmatprep.subr.bf16.mxu0 0
        %729 = vmatpush1.bf16.msra.mxu0 0
        %730 = vmatprep.subr.bf16.mxu0 0
        %731 = vmatpush1.bf16.msra.mxu0 0
        %732 = vmatprep.subr.bf16.mxu0 0
        %733 = vmatpush1.bf16.msra.mxu0 0
        %734 = vmatprep.mubr.bf16.mxu0 0
        %735 = vmatmul.mubr.bf16.gmra.mrb[0].mxu0 %v653
        %v736 = vpop.f32.mrb[0].mxu0
        %v737 = vadd.f32 0.0, %v736
        %v738 = vpop.f32.mrb[0].mxu0
        %v739 = vpop.f32.mrb[0].mxu0
        %v740 = vadd.f32 0.0, %v739
        %v741 = vpop.f32.mrb[0].mxu0
        %742 = vdwg.mxu0
        %v743 = vpack.c.bf16 %v740, %v737
        %v746 = vunpack.c.l.b16 %v635
        %v747 = vunpack.c.l.b16 %v636
        %v748 = vpack.c.b16 %v747, %v746
        %v750 = vsel %vm484, %v748, 0
        %752 = vmatprep.subr.bf16.mxu0 0
        %753 = vmatpush1.bf16.msra.mxu0 %v743
        %754 = vmatprep.subr.bf16.mxu0 0
        %755 = vmatpush1.bf16.msra.mxu0 0
        %756 = vmatprep.subr.bf16.mxu0 0
        %757 = vmatpush1.bf16.msra.mxu0 0
        %758 = vmatprep.subr.bf16.mxu0 0
        %759 = vmatpush1.bf16.msra.mxu0 0
        %760 = vmatprep.subr.bf16.mxu0 0
        %761 = vmatpush1.bf16.msra.mxu0 0
        %762 = vmatprep.subr.bf16.mxu0 0
        %763 = vmatpush1.bf16.msra.mxu0 0
        %764 = vmatprep.subr.bf16.mxu0 0
        %765 = vmatpush1.bf16.msra.mxu0 0
        %766 = vmatprep.subr.bf16.mxu0 0
        %767 = vmatpush1.bf16.msra.mxu0 0
        %768 = vmatprep.subr.bf16.mxu0 0
        %769 = vmatpush1.bf16.msra.mxu0 0
        %770 = vmatprep.subr.bf16.mxu0 0
        %771 = vmatpush1.bf16.msra.mxu0 0
        %772 = vmatprep.subr.bf16.mxu0 0
        %773 = vmatpush1.bf16.msra.mxu0 0
        %774 = vmatprep.subr.bf16.mxu0 0
        %775 = vmatpush1.bf16.msra.mxu0 0
        %776 = vmatprep.subr.bf16.mxu0 0
        %777 = vmatpush1.bf16.msra.mxu0 0
        %778 = vmatprep.subr.bf16.mxu0 0
        %779 = vmatpush1.bf16.msra.mxu0 0
        %780 = vmatprep.subr.bf16.mxu0 0
        %781 = vmatpush1.bf16.msra.mxu0 0
        %782 = vmatprep.subr.bf16.mxu0 0
        %783 = vmatpush1.bf16.msra.mxu0 0
        %784 = vmatprep.mubr.bf16.mxu0 0
        %785 = vmatmul.mubr.bf16.gmra.mrb[0].mxu0 %v750
        %v786 = vpop.f32.mrb[0].mxu0
        %v787 = vadd.f32 0.0, %v786
        %v788 = vpop.f32.mrb[0].mxu0
        %v789 = vpop.f32.mrb[0].mxu0
        %v790 = vadd.f32 0.0, %v789
        %v791 = vpop.f32.mrb[0].mxu0
        %792 = vdwg.mxu0
        %v793 = vmax.f32 %v787, 0.0
        %v794 = vmax.f32 %v790, 0.0
        %v795 = vld [vmem:[#allocation12] sm:$0xf]
        %v796 = vld [vmem:[#allocation12 + $0x4] sm:$0xf]
        %v797 = vld [vmem:[#allocation12 + $0x8] sm:$0xf]
        %v798 = vld [vmem:[#allocation12 + $0xc] sm:$0xf]
        %v799 = vld [vmem:[#allocation12 + $0x10] sm:$0xf]
        %v800 = vld [vmem:[#allocation12 + $0x14] sm:$0xf]
        %v801 = vld [vmem:[#allocation12 + $0x18] sm:$0xf]
        %v802 = vld [vmem:[#allocation12 + $0x1c] sm:$0xf]
        %v803 = vld [vmem:[#allocation12 + $0x20] sm:$0xf]
        %v804 = vld [vmem:[#allocation12 + $0x24] sm:$0xf]
        %v805 = vld [vmem:[#allocation12 + $0x28] sm:$0xf]
        %v806 = vld [vmem:[#allocation12 + $0x2c] sm:$0xf]
        %v807 = vld [vmem:[#allocation12 + $0x30] sm:$0xf]
        %v808 = vld [vmem:[#allocation12 + $0x34] sm:$0xf]
        %v809 = vld [vmem:[#allocation12 + $0x38] sm:$0xf]
        %v810 = vld [vmem:[#allocation12 + $0x3c] sm:$0xf]
        %v827 = vunpack.c.l.b16 %v795
        %v828 = vunpack.c.l.b16 %v796
        %v829 = vunpack.c.l.b16 %v797
        %v830 = vunpack.c.l.b16 %v798
        %v831 = vunpack.c.l.b16 %v799
        %v832 = vunpack.c.l.b16 %v800
        %v833 = vunpack.c.l.b16 %v801
        %v834 = vunpack.c.l.b16 %v802
        %v835 = vunpack.c.l.b16 %v803
        %v836 = vunpack.c.l.b16 %v804
        %v837 = vunpack.c.l.b16 %v805
        %v838 = vunpack.c.l.b16 %v806
        %v839 = vunpack.c.l.b16 %v807
        %v840 = vunpack.c.l.b16 %v808
        %v841 = vunpack.c.l.b16 %v809
        %v842 = vunpack.c.l.b16 %v810
        %v843 = vpack.c.b16 %v828, %v827
        %v844 = vpack.c.b16 %v830, %v829
        %v845 = vpack.c.b16 %v832, %v831
        %v846 = vpack.c.b16 %v834, %v833
        %v847 = vpack.c.b16 %v836, %v835
        %v848 = vpack.c.b16 %v838, %v837
        %v849 = vpack.c.b16 %v840, %v839
        %v850 = vpack.c.b16 %v842, %v841
        %859 = vmatprep.subr.bf16.mxu0 0
        %860 = vmatpush1.bf16.msra.mxu0 %v843
        %861 = vmatprep.subr.bf16.mxu0 0
        %862 = vmatpush1.bf16.msra.mxu0 %v844
        %863 = vmatprep.subr.bf16.mxu0 0
        %864 = vmatpush1.bf16.msra.mxu0 %v845
        %865 = vmatprep.subr.bf16.mxu0 0
        %866 = vmatpush1.bf16.msra.mxu0 %v846
        %867 = vmatprep.subr.bf16.mxu0 0
        %868 = vmatpush1.bf16.msra.mxu0 %v847
        %869 = vmatprep.subr.bf16.mxu0 0
        %870 = vmatpush1.bf16.msra.mxu0 %v848
        %871 = vmatprep.subr.bf16.mxu0 0
        %872 = vmatpush1.bf16.msra.mxu0 %v849
        %873 = vmatprep.subr.bf16.mxu0 0
        %874 = vmatpush1.bf16.msra.mxu0 %v850
        %875 = vmatprep.subr.bf16.mxu0 0
        %876 = vmatpush1.bf16.msra.mxu0 0
        %877 = vmatprep.subr.bf16.mxu0 0
        %878 = vmatpush1.bf16.msra.mxu0 0
        %879 = vmatprep.subr.bf16.mxu0 0
        %880 = vmatpush1.bf16.msra.mxu0 0
        %881 = vmatprep.subr.bf16.mxu0 0
        %882 = vmatpush1.bf16.msra.mxu0 0
        %883 = vmatprep.subr.bf16.mxu0 0
        %884 = vmatpush1.bf16.msra.mxu0 0
        %885 = vmatprep.subr.bf16.mxu0 0
        %886 = vmatpush1.bf16.msra.mxu0 0
        %887 = vmatprep.subr.bf16.mxu0 0
        %888 = vmatpush1.bf16.msra.mxu0 0
        %889 = vmatprep.subr.bf16.mxu0 0
        %890 = vmatpush1.bf16.msra.mxu0 0
        %891 = vmatprep.mubr.bf16.mxu0 0
        %892 = vmatmul.mubr.bf16.gmra.mrb[0].mxu0 %v478
        %v893 = vpop.f32.mrb[0].mxu0
        %v894 = vadd.f32 0.0, %v893
        %v895 = vpop.f32.mrb[0].mxu0
        %v896 = vpop.f32.mrb[0].mxu0
        %v897 = vadd.f32 0.0, %v896
        %v898 = vpop.f32.mrb[0].mxu0
        %899 = vdwg.mxu0
        %v900 = vld [vmem:[#allocation6] sm:$0xf]
        %v901 = vld [vmem:[#allocation6 + $0x4] sm:$0xf]
        %v902 = vpack.c.bf16 %v897, %v894
        %v905 = vunpack.c.l.b16 %v900
        %v906 = vunpack.c.l.b16 %v901
        %v907 = vpack.c.b16 %v906, %v905
        %v909 = vsel %vm484, %v907, 0
        %911 = vmatprep.subr.bf16.mxu0 0
        %912 = vmatpush1.bf16.msra.mxu0 %v902
        %913 = vmatprep.subr.bf16.mxu0 0
        %914 = vmatpush1.bf16.msra.mxu0 0
        %915 = vmatprep.subr.bf16.mxu0 0
        %916 = vmatpush1.bf16.msra.mxu0 0
        %917 = vmatprep.subr.bf16.mxu0 0
        %918 = vmatpush1.bf16.msra.mxu0 0
        %919 = vmatprep.subr.bf16.mxu0 0
        %920 = vmatpush1.bf16.msra.mxu0 0
        %921 = vmatprep.subr.bf16.mxu0 0
        %922 = vmatpush1.bf16.msra.mxu0 0
        %923 = vmatprep.subr.bf16.mxu0 0
        %924 = vmatpush1.bf16.msra.mxu0 0
        %925 = vmatprep.subr.bf16.mxu0 0
        %926 = vmatpush1.bf16.msra.mxu0 0
        %927 = vmatprep.subr.bf16.mxu0 0
        %928 = vmatpush1.bf16.msra.mxu0 0
        %929 = vmatprep.subr.bf16.mxu0 0
        %930 = vmatpush1.bf16.msra.mxu0 0
        %931 = vmatprep.subr.bf16.mxu0 0
        %932 = vmatpush1.bf16.msra.mxu0 0
        %933 = vmatprep.subr.bf16.mxu0 0
        %934 = vmatpush1.bf16.msra.mxu0 0
        %935 = vmatprep.subr.bf16.mxu0 0
        %936 = vmatpush1.bf16.msra.mxu0 0
        %937 = vmatprep.subr.bf16.mxu0 0
        %938 = vmatpush1.bf16.msra.mxu0 0
        %939 = vmatprep.subr.bf16.mxu0 0
        %940 = vmatpush1.bf16.msra.mxu0 0
        %941 = vmatprep.subr.bf16.mxu0 0
        %942 = vmatpush1.bf16.msra.mxu0 0
        %943 = vmatprep.mubr.bf16.mxu0 0
        %944 = vmatmul.mubr.bf16.gmra.mrb[0].mxu0 %v909
        %v945 = vpop.f32.mrb[0].mxu0
        %v946 = vadd.f32 0.0, %v945
        %v947 = vpop.f32.mrb[0].mxu0
        %v948 = vpop.f32.mrb[0].mxu0
        %v949 = vadd.f32 0.0, %v948
        %v950 = vpop.f32.mrb[0].mxu0
        %951 = vdwg.mxu0
        %v952 = vmax.f32 %v946, 0.0
        %v953 = vmax.f32 %v949, 0.0
        %954 = vst [vmem:[%s465] sm:$0xff] %v952
        %955 = vst [vmem:[%s465 + $0x8] sm:$0xff] %v953
        %s956 = scalar_lea.vmem [#allocation7], 8
        %v957 = vld [vmem:[%s956] sm:$0xf]
        %v958 = vld [vmem:[%s956 + $0x4] sm:$0xf]
        %s959 = scalar_lea.vmem [#allocation10], 64
        %v960 = vld [vmem:[%s959] sm:$0xf]
        %v961 = vld [vmem:[%s959 + $0x4] sm:$0xf]
        %v962 = vld [vmem:[%s959 + $0x8] sm:$0xf]
        %v963 = vld [vmem:[%s959 + $0xc] sm:$0xf]
        %v964 = vld [vmem:[%s959 + $0x10] sm:$0xf]
        %v965 = vld [vmem:[%s959 + $0x14] sm:$0xf]
        %v966 = vld [vmem:[%s959 + $0x18] sm:$0xf]
        %v967 = vld [vmem:[%s959 + $0x1c] sm:$0xf]
        %v968 = vld [vmem:[%s959 + $0x20] sm:$0xf]
        %v969 = vld [vmem:[%s959 + $0x24] sm:$0xf]
        %v970 = vld [vmem:[%s959 + $0x28] sm:$0xf]
        %v971 = vld [vmem:[%s959 + $0x2c] sm:$0xf]
        %v972 = vld [vmem:[%s959 + $0x30] sm:$0xf]
        %v973 = vld [vmem:[%s959 + $0x34] sm:$0xf]
        %v974 = vld [vmem:[%s959 + $0x38] sm:$0xf]
        %v975 = vld [vmem:[%s959 + $0x3c] sm:$0xf]
        %v976 = vpack.c.bf16 %v794, %v793
        %v993 = vunpack.c.l.b16 %v960
        %v994 = vunpack.c.l.b16 %v961
        %v995 = vunpack.c.l.b16 %v962
        %v996 = vunpack.c.l.b16 %v963
        %v997 = vunpack.c.l.b16 %v964
        %v998 = vunpack.c.l.b16 %v965
        %v999 = vunpack.c.l.b16 %v966
        %v1000 = vunpack.c.l.b16 %v967
        %v1001 = vunpack.c.l.b16 %v968
        %v1002 = vunpack.c.l.b16 %v969
        %v1003 = vunpack.c.l.b16 %v970
        %v1004 = vunpack.c.l.b16 %v971
        %v1005 = vunpack.c.l.b16 %v972
        %v1006 = vunpack.c.l.b16 %v973
        %v1007 = vunpack.c.l.b16 %v974
        %v1008 = vunpack.c.l.b16 %v975
        %v1009 = vpack.c.b16 %v994, %v993
        %v1010 = vpack.c.b16 %v996, %v995
        %v1011 = vpack.c.b16 %v998, %v997
        %v1012 = vpack.c.b16 %v1000, %v999
        %v1013 = vpack.c.b16 %v1002, %v1001
        %v1014 = vpack.c.b16 %v1004, %v1003
        %v1015 = vpack.c.b16 %v1006, %v1005
        %v1016 = vpack.c.b16 %v1008, %v1007
        %1025 = vmatprep.subr.bf16.mxu0 0
        %1026 = vmatpush1.bf16.msra.mxu0 %v1009
        %1027 = vmatprep.subr.bf16.mxu0 0
        %1028 = vmatpush1.bf16.msra.mxu0 %v1010
        %1029 = vmatprep.subr.bf16.mxu0 0
        %1030 = vmatpush1.bf16.msra.mxu0 %v1011
        %1031 = vmatprep.subr.bf16.mxu0 0
        %1032 = vmatpush1.bf16.msra.mxu0 %v1012
        %1033 = vmatprep.subr.bf16.mxu0 0
        %1034 = vmatpush1.bf16.msra.mxu0 %v1013
        %1035 = vmatprep.subr.bf16.mxu0 0
        %1036 = vmatpush1.bf16.msra.mxu0 %v1014
        %1037 = vmatprep.subr.bf16.mxu0 0
        %1038 = vmatpush1.bf16.msra.mxu0 %v1015
        %1039 = vmatprep.subr.bf16.mxu0 0
        %1040 = vmatpush1.bf16.msra.mxu0 %v1016
        %1041 = vmatprep.subr.bf16.mxu0 0
        %1042 = vmatpush1.bf16.msra.mxu0 0
        %1043 = vmatprep.subr.bf16.mxu0 0
        %1044 = vmatpush1.bf16.msra.mxu0 0
        %1045 = vmatprep.subr.bf16.mxu0 0
        %1046 = vmatpush1.bf16.msra.mxu0 0
        %1047 = vmatprep.subr.bf16.mxu0 0
        %1048 = vmatpush1.bf16.msra.mxu0 0
        %1049 = vmatprep.subr.bf16.mxu0 0
        %1050 = vmatpush1.bf16.msra.mxu0 0
        %1051 = vmatprep.subr.bf16.mxu0 0
        %1052 = vmatpush1.bf16.msra.mxu0 0
        %1053 = vmatprep.subr.bf16.mxu0 0
        %1054 = vmatpush1.bf16.msra.mxu0 0
        %1055 = vmatprep.subr.bf16.mxu0 0
        %1056 = vmatpush1.bf16.msra.mxu0 0
        %1057 = vmatprep.mubr.bf16.mxu0 0
        %1058 = vmatmul.mubr.bf16.gmra.mrb[0].mxu0 %v976
        %v1059 = vpop.f32.mrb[0].mxu0
        %v1060 = vadd.f32 0.0, %v1059
        %v1061 = vpop.f32.mrb[0].mxu0
        %v1062 = vpop.f32.mrb[0].mxu0
        %v1063 = vadd.f32 0.0, %v1062
        %v1064 = vpop.f32.mrb[0].mxu0
        %1065 = vdwg.mxu0
        %v1066 = vpack.c.bf16 %v1063, %v1060
        %v1069 = vunpack.c.l.b16 %v957
        %v1070 = vunpack.c.l.b16 %v958
        %v1071 = vpack.c.b16 %v1070, %v1069
        %v1073 = vsel %vm484, %v1071, 0
        %1075 = vmatprep.subr.bf16.mxu0 0
        %1076 = vmatpush1.bf16.msra.mxu0 %v1066
        %1077 = vmatprep.subr.bf16.mxu0 0
        %1078 = vmatpush1.bf16.msra.mxu0 0
        %1079 = vmatprep.subr.bf16.mxu0 0
        %1080 = vmatpush1.bf16.msra.mxu0 0
        %1081 = vmatprep.subr.bf16.mxu0 0
        %1082 = vmatpush1.bf16.msra.mxu0 0
        %1083 = vmatprep.subr.bf16.mxu0 0
        %1084 = vmatpush1.bf16.msra.mxu0 0
        %1085 = vmatprep.subr.bf16.mxu0 0
        %1086 = vmatpush1.bf16.msra.mxu0 0
        %1087 = vmatprep.subr.bf16.mxu0 0
        %1088 = vmatpush1.bf16.msra.mxu0 0
        %1089 = vmatprep.subr.bf16.mxu0 0
        %1090 = vmatpush1.bf16.msra.mxu0 0
        %1091 = vmatprep.subr.bf16.mxu0 0
        %1092 = vmatpush1.bf16.msra.mxu0 0
        %1093 = vmatprep.subr.bf16.mxu0 0
        %1094 = vmatpush1.bf16.msra.mxu0 0
        %1095 = vmatprep.subr.bf16.mxu0 0
        %1096 = vmatpush1.bf16.msra.mxu0 0
        %1097 = vmatprep.subr.bf16.mxu0 0
        %1098 = vmatpush1.bf16.msra.mxu0 0
        %1099 = vmatprep.subr.bf16.mxu0 0
        %1100 = vmatpush1.bf16.msra.mxu0 0
        %1101 = vmatprep.subr.bf16.mxu0 0
        %1102 = vmatpush1.bf16.msra.mxu0 0
        %1103 = vmatprep.subr.bf16.mxu0 0
        %1104 = vmatpush1.bf16.msra.mxu0 0
        %1105 = vmatprep.subr.bf16.mxu0 0
        %1106 = vmatpush1.bf16.msra.mxu0 0
        %1107 = vmatprep.mubr.bf16.mxu0 0
        %1108 = vmatmul.mubr.bf16.gmra.mrb[0].mxu0 %v1073
        %v1109 = vpop.f32.mrb[0].mxu0
        %v1110 = vadd.f32 0.0, %v1109
        %v1111 = vpop.f32.mrb[0].mxu0
        %v1112 = vpop.f32.mrb[0].mxu0
        %v1113 = vadd.f32 0.0, %v1112
        %v1114 = vpop.f32.mrb[0].mxu0
        %1115 = vdwg.mxu0
        %v1116 = vmax.f32 %v1110, 0.0
        %v1117 = vmax.f32 %v1113, 0.0
        %v1118 = vld [vmem:[%s8] sm:$0xf]
        %v1119 = vld [vmem:[%s8 + $0x4] sm:$0xf]
        %v1120 = vld [vmem:[%s8 + $0x8] sm:$0xf]
        %v1121 = vld [vmem:[%s8 + $0xc] sm:$0xf]
        %v1122 = vld [vmem:[%s8 + $0x10] sm:$0xf]
        %v1123 = vld [vmem:[%s8 + $0x14] sm:$0xf]
        %v1124 = vld [vmem:[%s8 + $0x18] sm:$0xf]
        %v1125 = vld [vmem:[%s8 + $0x1c] sm:$0xf]
        %v1126 = vld [vmem:[%s8 + $0x20] sm:$0xf]
        %v1127 = vld [vmem:[%s8 + $0x24] sm:$0xf]
        %v1128 = vld [vmem:[%s8 + $0x28] sm:$0xf]
        %v1129 = vld [vmem:[%s8 + $0x2c] sm:$0xf]
        %v1130 = vld [vmem:[%s8 + $0x30] sm:$0xf]
        %v1131 = vld [vmem:[%s8 + $0x34] sm:$0xf]
        %v1132 = vld [vmem:[%s8 + $0x38] sm:$0xf]
        %v1133 = vld [vmem:[%s8 + $0x3c] sm:$0xf]
        %v1134 = vpack.c.bf16 %v953, %v952
        %v1135 = vpack.c.bf16 %v1117, %v1116
        %v1138 = vunpack.c.l.b16 %v476
        %v1139 = vunpack.c.l.b16 %v477
        %v1140 = vpack.c.b16 %v1139, %v1138
        %v1142 = vsel %vm484, %v1140, 0
        %1144 = vmatprep.subr.bf16.mxu0 0
        %1145 = vmatpush1.bf16.msra.mxu0 %v1135
        %1146 = vmatprep.subr.bf16.mxu0 0
        %1147 = vmatpush1.bf16.msra.mxu0 0
        %1148 = vmatprep.subr.bf16.mxu0 0
        %1149 = vmatpush1.bf16.msra.mxu0 0
        %1150 = vmatprep.subr.bf16.mxu0 0
        %1151 = vmatpush1.bf16.msra.mxu0 0
        %1152 = vmatprep.subr.bf16.mxu0 0
        %1153 = vmatpush1.bf16.msra.mxu0 0
        %1154 = vmatprep.subr.bf16.mxu0 0
        %1155 = vmatpush1.bf16.msra.mxu0 0
        %1156 = vmatprep.subr.bf16.mxu0 0
        %1157 = vmatpush1.bf16.msra.mxu0 0
        %1158 = vmatprep.subr.bf16.mxu0 0
        %1159 = vmatpush1.bf16.msra.mxu0 0
        %1160 = vmatprep.subr.bf16.mxu0 0
        %1161 = vmatpush1.bf16.msra.mxu0 0
        %1162 = vmatprep.subr.bf16.mxu0 0
        %1163 = vmatpush1.bf16.msra.mxu0 0
        %1164 = vmatprep.subr.bf16.mxu0 0
        %1165 = vmatpush1.bf16.msra.mxu0 0
        %1166 = vmatprep.subr.bf16.mxu0 0
        %1167 = vmatpush1.bf16.msra.mxu0 0
        %1168 = vmatprep.subr.bf16.mxu0 0
        %1169 = vmatpush1.bf16.msra.mxu0 0
        %1170 = vmatprep.subr.bf16.mxu0 0
        %1171 = vmatpush1.bf16.msra.mxu0 0
        %1172 = vmatprep.subr.bf16.mxu0 0
        %1173 = vmatpush1.bf16.msra.mxu0 0
        %1174 = vmatprep.subr.bf16.mxu0 0
        %1175 = vmatpush1.bf16.msra.mxu0 0
        %1176 = vmatprep.mubr.bf16.mxu0 0
        %1177 = vmatmul.mubr.bf16.gmra.mrb[0].mxu0 %v1142
        %v1178 = vpop.f32.mrb[0].mxu0
        %v1179 = vadd.f32 0.0, %v1178
        %v1180 = vpop.f32.mrb[0].mxu0
        %v1181 = vpop.f32.mrb[0].mxu0
        %v1182 = vadd.f32 0.0, %v1181
        %v1183 = vpop.f32.mrb[0].mxu0
        %1184 = vdwg.mxu0
        %v1185 = vld [vmem:[#allocation13] sm:$0xf]
        %v1186 = vld [vmem:[#allocation13 + $0x4] sm:$0xf]
        %v1187 = vld [vmem:[#allocation13 + $0x8] sm:$0xf]
        %v1188 = vld [vmem:[#allocation13 + $0xc] sm:$0xf]
        %v1189 = vld [vmem:[#allocation13 + $0x10] sm:$0xf]
        %v1190 = vld [vmem:[#allocation13 + $0x14] sm:$0xf]
        %v1191 = vld [vmem:[#allocation13 + $0x18] sm:$0xf]
        %v1192 = vld [vmem:[#allocation13 + $0x1c] sm:$0xf]
        %v1193 = vld [vmem:[#allocation13 + $0x20] sm:$0xf]
        %v1194 = vld [vmem:[#allocation13 + $0x24] sm:$0xf]
        %v1195 = vld [vmem:[#allocation13 + $0x28] sm:$0xf]
        %v1196 = vld [vmem:[#allocation13 + $0x2c] sm:$0xf]
        %v1197 = vld [vmem:[#allocation13 + $0x30] sm:$0xf]
        %v1198 = vld [vmem:[#allocation13 + $0x34] sm:$0xf]
        %v1199 = vld [vmem:[#allocation13 + $0x38] sm:$0xf]
        %v1200 = vld [vmem:[#allocation13 + $0x3c] sm:$0xf]
        %v1201 = vpack.c.bf16 %v1182, %v1179
        %v1218 = vunpack.c.l.b16 %v1185
        %v1219 = vunpack.c.l.b16 %v1186
        %v1220 = vunpack.c.l.b16 %v1187
        %v1221 = vunpack.c.l.b16 %v1188
        %v1222 = vunpack.c.l.b16 %v1189
        %v1223 = vunpack.c.l.b16 %v1190
        %v1224 = vunpack.c.l.b16 %v1191
        %v1225 = vunpack.c.l.b16 %v1192
        %v1226 = vunpack.c.l.b16 %v1193
        %v1227 = vunpack.c.l.b16 %v1194
        %v1228 = vunpack.c.l.b16 %v1195
        %v1229 = vunpack.c.l.b16 %v1196
        %v1230 = vunpack.c.l.b16 %v1197
        %v1231 = vunpack.c.l.b16 %v1198
        %v1232 = vunpack.c.l.b16 %v1199
        %v1233 = vunpack.c.l.b16 %v1200
        %v1234 = vpack.c.b16 %v1219, %v1218
        %v1235 = vpack.c.b16 %v1221, %v1220
        %v1236 = vpack.c.b16 %v1223, %v1222
        %v1237 = vpack.c.b16 %v1225, %v1224
        %v1238 = vpack.c.b16 %v1227, %v1226
        %v1239 = vpack.c.b16 %v1229, %v1228
        %v1240 = vpack.c.b16 %v1231, %v1230
        %v1241 = vpack.c.b16 %v1233, %v1232
        %1250 = vmatprep.subr.bf16.mxu0 0
        %1251 = vmatpush1.bf16.msra.mxu0 %v1234
        %1252 = vmatprep.subr.bf16.mxu0 0
        %1253 = vmatpush1.bf16.msra.mxu0 %v1235
        %1254 = vmatprep.subr.bf16.mxu0 0
        %1255 = vmatpush1.bf16.msra.mxu0 %v1236
        %1256 = vmatprep.subr.bf16.mxu0 0
        %1257 = vmatpush1.bf16.msra.mxu0 %v1237
        %1258 = vmatprep.subr.bf16.mxu0 0
        %1259 = vmatpush1.bf16.msra.mxu0 %v1238
        %1260 = vmatprep.subr.bf16.mxu0 0
        %1261 = vmatpush1.bf16.msra.mxu0 %v1239
        %1262 = vmatprep.subr.bf16.mxu0 0
        %1263 = vmatpush1.bf16.msra.mxu0 %v1240
        %1264 = vmatprep.subr.bf16.mxu0 0
        %1265 = vmatpush1.bf16.msra.mxu0 %v1241
        %1266 = vmatprep.subr.bf16.mxu0 0
        %1267 = vmatpush1.bf16.msra.mxu0 0
        %1268 = vmatprep.subr.bf16.mxu0 0
        %1269 = vmatpush1.bf16.msra.mxu0 0
        %1270 = vmatprep.subr.bf16.mxu0 0
        %1271 = vmatpush1.bf16.msra.mxu0 0
        %1272 = vmatprep.subr.bf16.mxu0 0
        %1273 = vmatpush1.bf16.msra.mxu0 0
        %1274 = vmatprep.subr.bf16.mxu0 0
        %1275 = vmatpush1.bf16.msra.mxu0 0
        %1276 = vmatprep.subr.bf16.mxu0 0
        %1277 = vmatpush1.bf16.msra.mxu0 0
        %1278 = vmatprep.subr.bf16.mxu0 0
        %1279 = vmatpush1.bf16.msra.mxu0 0
        %1280 = vmatprep.subr.bf16.mxu0 0
        %1281 = vmatpush1.bf16.msra.mxu0 0
        %1282 = vmatprep.mubr.bf16.mxu0 0
        %1283 = vmatmul.mubr.bf16.gmra.mrb[0].mxu0 %v1201
        %v1284 = vpop.f32.mrb[0].mxu0
        %v1285 = vadd.f32 0.0, %v1284
        %v1286 = vpop.f32.mrb[0].mxu0
        %v1287 = vpop.f32.mrb[0].mxu0
        %v1288 = vadd.f32 0.0, %v1287
        %v1289 = vpop.f32.mrb[0].mxu0
        %1290 = vdwg.mxu0
        %v1307 = vunpack.c.l.b16 %v1118
        %v1308 = vunpack.c.l.b16 %v1119
        %v1309 = vunpack.c.l.b16 %v1120
        %v1310 = vunpack.c.l.b16 %v1121
        %v1311 = vunpack.c.l.b16 %v1122
        %v1312 = vunpack.c.l.b16 %v1123
        %v1313 = vunpack.c.l.b16 %v1124
        %v1314 = vunpack.c.l.b16 %v1125
        %v1315 = vunpack.c.l.b16 %v1126
        %v1316 = vunpack.c.l.b16 %v1127
        %v1317 = vunpack.c.l.b16 %v1128
        %v1318 = vunpack.c.l.b16 %v1129
        %v1319 = vunpack.c.l.b16 %v1130
        %v1320 = vunpack.c.l.b16 %v1131
        %v1321 = vunpack.c.l.b16 %v1132
        %v1322 = vunpack.c.l.b16 %v1133
        %v1323 = vpack.c.b16 %v1308, %v1307
        %v1324 = vpack.c.b16 %v1310, %v1309
        %v1325 = vpack.c.b16 %v1312, %v1311
        %v1326 = vpack.c.b16 %v1314, %v1313
        %v1327 = vpack.c.b16 %v1316, %v1315
        %v1328 = vpack.c.b16 %v1318, %v1317
        %v1329 = vpack.c.b16 %v1320, %v1319
        %v1330 = vpack.c.b16 %v1322, %v1321
        %1339 = vmatprep.subr.bf16.mxu0 0
        %1340 = vmatpush1.bf16.msra.mxu0 %v1323
        %1341 = vmatprep.subr.bf16.mxu0 0
        %1342 = vmatpush1.bf16.msra.mxu0 %v1324
        %1343 = vmatprep.subr.bf16.mxu0 0
        %1344 = vmatpush1.bf16.msra.mxu0 %v1325
        %1345 = vmatprep.subr.bf16.mxu0 0
        %1346 = vmatpush1.bf16.msra.mxu0 %v1326
        %1347 = vmatprep.subr.bf16.mxu0 0
        %1348 = vmatpush1.bf16.msra.mxu0 %v1327
        %1349 = vmatprep.subr.bf16.mxu0 0
        %1350 = vmatpush1.bf16.msra.mxu0 %v1328
        %1351 = vmatprep.subr.bf16.mxu0 0
        %1352 = vmatpush1.bf16.msra.mxu0 %v1329
        %1353 = vmatprep.subr.bf16.mxu0 0
        %1354 = vmatpush1.bf16.msra.mxu0 %v1330
        %1355 = vmatprep.subr.bf16.mxu0 0
        %1356 = vmatpush1.bf16.msra.mxu0 0
        %1357 = vmatprep.subr.bf16.mxu0 0
        %1358 = vmatpush1.bf16.msra.mxu0 0
        %1359 = vmatprep.subr.bf16.mxu0 0
        %1360 = vmatpush1.bf16.msra.mxu0 0
        %1361 = vmatprep.subr.bf16.mxu0 0
        %1362 = vmatpush1.bf16.msra.mxu0 0
        %1363 = vmatprep.subr.bf16.mxu0 0
        %1364 = vmatpush1.bf16.msra.mxu0 0
        %1365 = vmatprep.subr.bf16.mxu0 0
        %1366 = vmatpush1.bf16.msra.mxu0 0
        %1367 = vmatprep.subr.bf16.mxu0 0
        %1368 = vmatpush1.bf16.msra.mxu0 0
        %1369 = vmatprep.subr.bf16.mxu0 0
        %1370 = vmatpush1.bf16.msra.mxu0 0
        %1371 = vmatprep.mubr.bf16.mxu0 0
        %1372 = vmatmul.mubr.bf16.gmra.mrb[0].mxu0 %v1134
        %v1373 = vpop.f32.mrb[0].mxu0
        %v1374 = vadd.f32 %v1285, %v1373
        %v1375 = vpop.f32.mrb[0].mxu0
        %v1376 = vpop.f32.mrb[0].mxu0
        %v1377 = vadd.f32 %v1288, %v1376
        %v1378 = vpop.f32.mrb[0].mxu0
        %1379 = vdwg.mxu0
        %s1380 = scalar_lea.vmem [#allocation6], 8
        %v1381 = vld [vmem:[%s1380] sm:$0xf]
        %v1382 = vld [vmem:[%s1380 + $0x4] sm:$0xf]
        %v1383 = vpack.c.bf16 %v1377, %v1374
        %v1386 = vunpack.c.l.b16 %v1381
        %v1387 = vunpack.c.l.b16 %v1382
        %v1388 = vpack.c.b16 %v1387, %v1386
        %v1390 = vsel %vm484, %v1388, 0
        %1392 = vmatprep.subr.bf16.mxu0 0
        %1393 = vmatpush1.bf16.msra.mxu0 %v1383
        %1394 = vmatprep.subr.bf16.mxu0 0
        %1395 = vmatpush1.bf16.msra.mxu0 0
        %1396 = vmatprep.subr.bf16.mxu0 0
        %1397 = vmatpush1.bf16.msra.mxu0 0
        %1398 = vmatprep.subr.bf16.mxu0 0
        %1399 = vmatpush1.bf16.msra.mxu0 0
        %1400 = vmatprep.subr.bf16.mxu0 0
        %1401 = vmatpush1.bf16.msra.mxu0 0
        %1402 = vmatprep.subr.bf16.mxu0 0
        %1403 = vmatpush1.bf16.msra.mxu0 0
        %1404 = vmatprep.subr.bf16.mxu0 0
        %1405 = vmatpush1.bf16.msra.mxu0 0
        %1406 = vmatprep.subr.bf16.mxu0 0
        %1407 = vmatpush1.bf16.msra.mxu0 0
        %1408 = vmatprep.subr.bf16.mxu0 0
        %1409 = vmatpush1.bf16.msra.mxu0 0
        %1410 = vmatprep.subr.bf16.mxu0 0
        %1411 = vmatpush1.bf16.msra.mxu0 0
        %1412 = vmatprep.subr.bf16.mxu0 0
        %1413 = vmatpush1.bf16.msra.mxu0 0
        %1414 = vmatprep.subr.bf16.mxu0 0
        %1415 = vmatpush1.bf16.msra.mxu0 0
        %1416 = vmatprep.subr.bf16.mxu0 0
        %1417 = vmatpush1.bf16.msra.mxu0 0
        %1418 = vmatprep.subr.bf16.mxu0 0
        %1419 = vmatpush1.bf16.msra.mxu0 0
        %1420 = vmatprep.subr.bf16.mxu0 0
        %1421 = vmatpush1.bf16.msra.mxu0 0
        %1422 = vmatprep.subr.bf16.mxu0 0
        %1423 = vmatpush1.bf16.msra.mxu0 0
        %1424 = vmatprep.mubr.bf16.mxu0 0
        %1425 = vmatmul.mubr.bf16.gmra.mrb[0].mxu0 %v1390
        %v1426 = vpop.f32.mrb[0].mxu0
        %v1427 = vadd.f32 0.0, %v1426
        %v1428 = vpop.f32.mrb[0].mxu0
        %v1429 = vpop.f32.mrb[0].mxu0
        %v1430 = vadd.f32 0.0, %v1429
        %v1431 = vpop.f32.mrb[0].mxu0
        %1432 = vdwg.mxu0
        %v1433 = vmax.f32 %v1427, 0.0
        %v1434 = vmax.f32 %v1430, 0.0
        %s1435 = scalar_lea.vmem %s465, 16 [#allocation15]
        %1436 = vst [vmem:[%s1435] sm:$0xff] %v1433
        %1437 = vst [vmem:[%s1435 + $0x8] sm:$0xff] %v1434
        %s1438 = scalar_lea.vmem [#allocation7], 16
        %v1439 = vld [vmem:[%s1438] sm:$0xf]
        %v1440 = vld [vmem:[%s1438 + $0x4] sm:$0xf]
        %s1441 = scalar_lea.vmem [#allocation10], 128
        %v1442 = vld [vmem:[%s1441] sm:$0xf]
        %v1443 = vld [vmem:[%s1441 + $0x4] sm:$0xf]
        %v1444 = vld [vmem:[%s1441 + $0x8] sm:$0xf]
        %v1445 = vld [vmem:[%s1441 + $0xc] sm:$0xf]
        %v1446 = vld [vmem:[%s1441 + $0x10] sm:$0xf]
        %v1447 = vld [vmem:[%s1441 + $0x14] sm:$0xf]
        %v1448 = vld [vmem:[%s1441 + $0x18] sm:$0xf]
        %v1449 = vld [vmem:[%s1441 + $0x1c] sm:$0xf]
        %v1450 = vld [vmem:[%s1441 + $0x20] sm:$0xf]
        %v1451 = vld [vmem:[%s1441 + $0x24] sm:$0xf]
        %v1452 = vld [vmem:[%s1441 + $0x28] sm:$0xf]
        %v1453 = vld [vmem:[%s1441 + $0x2c] sm:$0xf]
        %v1454 = vld [vmem:[%s1441 + $0x30] sm:$0xf]
        %v1455 = vld [vmem:[%s1441 + $0x34] sm:$0xf]
        %v1456 = vld [vmem:[%s1441 + $0x38] sm:$0xf]
        %v1457 = vld [vmem:[%s1441 + $0x3c] sm:$0xf]
        %v1474 = vunpack.c.l.b16 %v1442
        %v1475 = vunpack.c.l.b16 %v1443
        %v1476 = vunpack.c.l.b16 %v1444
        %v1477 = vunpack.c.l.b16 %v1445
        %v1478 = vunpack.c.l.b16 %v1446
        %v1479 = vunpack.c.l.b16 %v1447
        %v1480 = vunpack.c.l.b16 %v1448
        %v1481 = vunpack.c.l.b16 %v1449
        %v1482 = vunpack.c.l.b16 %v1450
        %v1483 = vunpack.c.l.b16 %v1451
        %v1484 = vunpack.c.l.b16 %v1452
        %v1485 = vunpack.c.l.b16 %v1453
        %v1486 = vunpack.c.l.b16 %v1454
        %v1487 = vunpack.c.l.b16 %v1455
        %v1488 = vunpack.c.l.b16 %v1456
        %v1489 = vunpack.c.l.b16 %v1457
        %v1490 = vpack.c.b16 %v1475, %v1474
        %v1491 = vpack.c.b16 %v1477, %v1476
        %v1492 = vpack.c.b16 %v1479, %v1478
        %v1493 = vpack.c.b16 %v1481, %v1480
        %v1494 = vpack.c.b16 %v1483, %v1482
        %v1495 = vpack.c.b16 %v1485, %v1484
        %v1496 = vpack.c.b16 %v1487, %v1486
        %v1497 = vpack.c.b16 %v1489, %v1488
        %1506 = vmatprep.subr.bf16.mxu0 0
        %1507 = vmatpush1.bf16.msra.mxu0 %v1490
        %1508 = vmatprep.subr.bf16.mxu0 0
        %1509 = vmatpush1.bf16.msra.mxu0 %v1491
        %1510 = vmatprep.subr.bf16.mxu0 0
        %1511 = vmatpush1.bf16.msra.mxu0 %v1492
        %1512 = vmatprep.subr.bf16.mxu0 0
        %1513 = vmatpush1.bf16.msra.mxu0 %v1493
        %1514 = vmatprep.subr.bf16.mxu0 0
        %1515 = vmatpush1.bf16.msra.mxu0 %v1494
        %1516 = vmatprep.subr.bf16.mxu0 0
        %1517 = vmatpush1.bf16.msra.mxu0 %v1495
        %1518 = vmatprep.subr.bf16.mxu0 0
        %1519 = vmatpush1.bf16.msra.mxu0 %v1496
        %1520 = vmatprep.subr.bf16.mxu0 0
        %1521 = vmatpush1.bf16.msra.mxu0 %v1497
        %1522 = vmatprep.subr.bf16.mxu0 0
        %1523 = vmatpush1.bf16.msra.mxu0 0
        %1524 = vmatprep.subr.bf16.mxu0 0
        %1525 = vmatpush1.bf16.msra.mxu0 0
        %1526 = vmatprep.subr.bf16.mxu0 0
        %1527 = vmatpush1.bf16.msra.mxu0 0
        %1528 = vmatprep.subr.bf16.mxu0 0
        %1529 = vmatpush1.bf16.msra.mxu0 0
        %1530 = vmatprep.subr.bf16.mxu0 0
        %1531 = vmatpush1.bf16.msra.mxu0 0
        %1532 = vmatprep.subr.bf16.mxu0 0
        %1533 = vmatpush1.bf16.msra.mxu0 0
        %1534 = vmatprep.subr.bf16.mxu0 0
        %1535 = vmatpush1.bf16.msra.mxu0 0
        %1536 = vmatprep.subr.bf16.mxu0 0
        %1537 = vmatpush1.bf16.msra.mxu0 0
        %1538 = vmatprep.mubr.bf16.mxu0 0
        %1539 = vmatmul.mubr.bf16.gmra.mrb[0].mxu0 %v1135
        %v1540 = vpop.f32.mrb[0].mxu0
        %v1541 = vadd.f32 0.0, %v1540
        %v1542 = vpop.f32.mrb[0].mxu0
        %v1543 = vpop.f32.mrb[0].mxu0
        %v1544 = vadd.f32 0.0, %v1543
        %v1545 = vpop.f32.mrb[0].mxu0
        %1546 = vdwg.mxu0
        %v1547 = vpack.c.bf16 %v1544, %v1541
        %v1550 = vunpack.c.l.b16 %v1439
        %v1551 = vunpack.c.l.b16 %v1440
        %v1552 = vpack.c.b16 %v1551, %v1550
        %v1554 = vsel %vm484, %v1552, 0
        %1556 = vmatprep.subr.bf16.mxu0 0
        %1557 = vmatpush1.bf16.msra.mxu0 %v1547
        %1558 = vmatprep.subr.bf16.mxu0 0
        %1559 = vmatpush1.bf16.msra.mxu0 0
        %1560 = vmatprep.subr.bf16.mxu0 0
        %1561 = vmatpush1.bf16.msra.mxu0 0
        %1562 = vmatprep.subr.bf16.mxu0 0
        %1563 = vmatpush1.bf16.msra.mxu0 0
        %1564 = vmatprep.subr.bf16.mxu0 0
        %1565 = vmatpush1.bf16.msra.mxu0 0
        %1566 = vmatprep.subr.bf16.mxu0 0
        %1567 = vmatpush1.bf16.msra.mxu0 0
        %1568 = vmatprep.subr.bf16.mxu0 0
        %1569 = vmatpush1.bf16.msra.mxu0 0
        %1570 = vmatprep.subr.bf16.mxu0 0
        %1571 = vmatpush1.bf16.msra.mxu0 0
        %1572 = vmatprep.subr.bf16.mxu0 0
        %1573 = vmatpush1.bf16.msra.mxu0 0
        %1574 = vmatprep.subr.bf16.mxu0 0
        %1575 = vmatpush1.bf16.msra.mxu0 0
        %1576 = vmatprep.subr.bf16.mxu0 0
        %1577 = vmatpush1.bf16.msra.mxu0 0
        %1578 = vmatprep.subr.bf16.mxu0 0
        %1579 = vmatpush1.bf16.msra.mxu0 0
        %1580 = vmatprep.subr.bf16.mxu0 0
        %1581 = vmatpush1.bf16.msra.mxu0 0
        %1582 = vmatprep.subr.bf16.mxu0 0
        %1583 = vmatpush1.bf16.msra.mxu0 0
        %1584 = vmatprep.subr.bf16.mxu0 0
        %1585 = vmatpush1.bf16.msra.mxu0 0
        %1586 = vmatprep.subr.bf16.mxu0 0
        %1587 = vmatpush1.bf16.msra.mxu0 0
        %1588 = vmatprep.mubr.bf16.mxu0 0
        %1589 = vmatmul.mubr.bf16.gmra.mrb[0].mxu0 %v1554
        %v1590 = vpop.f32.mrb[0].mxu0
        %v1591 = vadd.f32 0.0, %v1590
        %v1592 = vpop.f32.mrb[0].mxu0
        %v1593 = vpop.f32.mrb[0].mxu0
        %v1594 = vadd.f32 0.0, %v1593
        %v1595 = vpop.f32.mrb[0].mxu0
        %1596 = vdwg.mxu0
        %v1597 = vmax.f32 %v1591, 0.0
        %v1598 = vmax.f32 %v1594, 0.0
        %s1599 = scalar_lea.vmem %s8, 64
        %v1600 = vld [vmem:[%s1599] sm:$0xf]
        %v1601 = vld [vmem:[%s1599 + $0x4] sm:$0xf]
        %v1602 = vld [vmem:[%s1599 + $0x8] sm:$0xf]
        %v1603 = vld [vmem:[%s1599 + $0xc] sm:$0xf]
        %v1604 = vld [vmem:[%s1599 + $0x10] sm:$0xf]
        %v1605 = vld [vmem:[%s1599 + $0x14] sm:$0xf]
        %v1606 = vld [vmem:[%s1599 + $0x18] sm:$0xf]
        %v1607 = vld [vmem:[%s1599 + $0x1c] sm:$0xf]
        %v1608 = vld [vmem:[%s1599 + $0x20] sm:$0xf]
        %v1609 = vld [vmem:[%s1599 + $0x24] sm:$0xf]
        %v1610 = vld [vmem:[%s1599 + $0x28] sm:$0xf]
        %v1611 = vld [vmem:[%s1599 + $0x2c] sm:$0xf]
        %v1612 = vld [vmem:[%s1599 + $0x30] sm:$0xf]
        %v1613 = vld [vmem:[%s1599 + $0x34] sm:$0xf]
        %v1614 = vld [vmem:[%s1599 + $0x38] sm:$0xf]
        %v1615 = vld [vmem:[%s1599 + $0x3c] sm:$0xf]
        %v1616 = vpack.c.bf16 %v1434, %v1433
        %v1617 = vpack.c.bf16 %v1598, %v1597
        %1618 = vmatprep.subr.bf16.mxu0 0
        %1619 = vmatpush1.bf16.msra.mxu0 %v1617
        %1620 = vmatprep.subr.bf16.mxu0 0
        %1621 = vmatpush1.bf16.msra.mxu0 0
        %1622 = vmatprep.subr.bf16.mxu0 0
        %1623 = vmatpush1.bf16.msra.mxu0 0
        %1624 = vmatprep.subr.bf16.mxu0 0
        %1625 = vmatpush1.bf16.msra.mxu0 0
        %1626 = vmatprep.subr.bf16.mxu0 0
        %1627 = vmatpush1.bf16.msra.mxu0 0
        %1628 = vmatprep.subr.bf16.mxu0 0
        %1629 = vmatpush1.bf16.msra.mxu0 0
        %1630 = vmatprep.subr.bf16.mxu0 0
        %1631 = vmatpush1.bf16.msra.mxu0 0
        %1632 = vmatprep.subr.bf16.mxu0 0
        %1633 = vmatpush1.bf16.msra.mxu0 0
        %1634 = vmatprep.subr.bf16.mxu0 0
        %1635 = vmatpush1.bf16.msra.mxu0 0
        %1636 = vmatprep.subr.bf16.mxu0 0
        %1637 = vmatpush1.bf16.msra.mxu0 0
        %1638 = vmatprep.subr.bf16.mxu0 0
        %1639 = vmatpush1.bf16.msra.mxu0 0
        %1640 = vmatprep.subr.bf16.mxu0 0
        %1641 = vmatpush1.bf16.msra.mxu0 0
        %1642 = vmatprep.subr.bf16.mxu0 0
        %1643 = vmatpush1.bf16.msra.mxu0 0
        %1644 = vmatprep.subr.bf16.mxu0 0
        %1645 = vmatpush1.bf16.msra.mxu0 0
        %1646 = vmatprep.subr.bf16.mxu0 0
        %1647 = vmatpush1.bf16.msra.mxu0 0
        %1648 = vmatprep.subr.bf16.mxu0 0
        %1649 = vmatpush1.bf16.msra.mxu0 0
        %1650 = vmatprep.mubr.bf16.mxu0 0
        %1651 = vmatmul.mubr.bf16.gmra.mrb[0].mxu0 %v1142
        %v1652 = vpop.f32.mrb[0].mxu0
        %v1653 = vadd.f32 0.0, %v1652
        %v1654 = vpop.f32.mrb[0].mxu0
        %v1655 = vpop.f32.mrb[0].mxu0
        %v1656 = vadd.f32 0.0, %v1655
        %v1657 = vpop.f32.mrb[0].mxu0
        %1658 = vdwg.mxu0
        %s1659 = scalar_lea.vmem [#allocation13], 64
        %v1660 = vld [vmem:[%s1659] sm:$0xf]
        %v1661 = vld [vmem:[%s1659 + $0x4] sm:$0xf]
        %v1662 = vld [vmem:[%s1659 + $0x8] sm:$0xf]
        %v1663 = vld [vmem:[%s1659 + $0xc] sm:$0xf]
        %v1664 = vld [vmem:[%s1659 + $0x10] sm:$0xf]
        %v1665 = vld [vmem:[%s1659 + $0x14] sm:$0xf]
        %v1666 = vld [vmem:[%s1659 + $0x18] sm:$0xf]
        %v1667 = vld [vmem:[%s1659 + $0x1c] sm:$0xf]
        %v1668 = vld [vmem:[%s1659 + $0x20] sm:$0xf]
        %v1669 = vld [vmem:[%s1659 + $0x24] sm:$0xf]
        %v1670 = vld [vmem:[%s1659 + $0x28] sm:$0xf]
        %v1671 = vld [vmem:[%s1659 + $0x2c] sm:$0xf]
        %v1672 = vld [vmem:[%s1659 + $0x30] sm:$0xf]
        %v1673 = vld [vmem:[%s1659 + $0x34] sm:$0xf]
        %v1674 = vld [vmem:[%s1659 + $0x38] sm:$0xf]
        %v1675 = vld [vmem:[%s1659 + $0x3c] sm:$0xf]
        %v1676 = vpack.c.bf16 %v1656, %v1653
        %v1693 = vunpack.c.l.b16 %v1660
        %v1694 = vunpack.c.l.b16 %v1661
        %v1695 = vunpack.c.l.b16 %v1662
        %v1696 = vunpack.c.l.b16 %v1663
        %v1697 = vunpack.c.l.b16 %v1664
        %v1698 = vunpack.c.l.b16 %v1665
        %v1699 = vunpack.c.l.b16 %v1666
        %v1700 = vunpack.c.l.b16 %v1667
        %v1701 = vunpack.c.l.b16 %v1668
        %v1702 = vunpack.c.l.b16 %v1669
        %v1703 = vunpack.c.l.b16 %v1670
        %v1704 = vunpack.c.l.b16 %v1671
        %v1705 = vunpack.c.l.b16 %v1672
        %v1706 = vunpack.c.l.b16 %v1673
        %v1707 = vunpack.c.l.b16 %v1674
        %v1708 = vunpack.c.l.b16 %v1675
        %v1709 = vpack.c.b16 %v1694, %v1693
        %v1710 = vpack.c.b16 %v1696, %v1695
        %v1711 = vpack.c.b16 %v1698, %v1697
        %v1712 = vpack.c.b16 %v1700, %v1699
        %v1713 = vpack.c.b16 %v1702, %v1701
        %v1714 = vpack.c.b16 %v1704, %v1703
        %v1715 = vpack.c.b16 %v1706, %v1705
        %v1716 = vpack.c.b16 %v1708, %v1707
        %1725 = vmatprep.subr.bf16.mxu0 0
        %1726 = vmatpush1.bf16.msra.mxu0 %v1709
        %1727 = vmatprep.subr.bf16.mxu0 0
        %1728 = vmatpush1.bf16.msra.mxu0 %v1710
        %1729 = vmatprep.subr.bf16.mxu0 0
        %1730 = vmatpush1.bf16.msra.mxu0 %v1711
        %1731 = vmatprep.subr.bf16.mxu0 0
        %1732 = vmatpush1.bf16.msra.mxu0 %v1712
        %1733 = vmatprep.subr.bf16.mxu0 0
        %1734 = vmatpush1.bf16.msra.mxu0 %v1713
        %1735 = vmatprep.subr.bf16.mxu0 0
        %1736 = vmatpush1.bf16.msra.mxu0 %v1714
        %1737 = vmatprep.subr.bf16.mxu0 0
        %1738 = vmatpush1.bf16.msra.mxu0 %v1715
        %1739 = vmatprep.subr.bf16.mxu0 0
        %1740 = vmatpush1.bf16.msra.mxu0 %v1716
        %1741 = vmatprep.subr.bf16.mxu0 0
        %1742 = vmatpush1.bf16.msra.mxu0 0
        %1743 = vmatprep.subr.bf16.mxu0 0
        %1744 = vmatpush1.bf16.msra.mxu0 0
        %1745 = vmatprep.subr.bf16.mxu0 0
        %1746 = vmatpush1.bf16.msra.mxu0 0
        %1747 = vmatprep.subr.bf16.mxu0 0
        %1748 = vmatpush1.bf16.msra.mxu0 0
        %1749 = vmatprep.subr.bf16.mxu0 0
        %1750 = vmatpush1.bf16.msra.mxu0 0
        %1751 = vmatprep.subr.bf16.mxu0 0
        %1752 = vmatpush1.bf16.msra.mxu0 0
        %1753 = vmatprep.subr.bf16.mxu0 0
        %1754 = vmatpush1.bf16.msra.mxu0 0
        %1755 = vmatprep.subr.bf16.mxu0 0
        %1756 = vmatpush1.bf16.msra.mxu0 0
        %1757 = vmatprep.mubr.bf16.mxu0 0
        %1758 = vmatmul.mubr.bf16.gmra.mrb[0].mxu0 %v1676
        %v1759 = vpop.f32.mrb[0].mxu0
        %v1760 = vadd.f32 0.0, %v1759
        %v1761 = vpop.f32.mrb[0].mxu0
        %v1762 = vpop.f32.mrb[0].mxu0
        %v1763 = vadd.f32 0.0, %v1762
        %v1764 = vpop.f32.mrb[0].mxu0
        %1765 = vdwg.mxu0
        %v1782 = vunpack.c.l.b16 %v1600
        %v1783 = vunpack.c.l.b16 %v1601
        %v1784 = vunpack.c.l.b16 %v1602
        %v1785 = vunpack.c.l.b16 %v1603
        %v1786 = vunpack.c.l.b16 %v1604
        %v1787 = vunpack.c.l.b16 %v1605
        %v1788 = vunpack.c.l.b16 %v1606
        %v1789 = vunpack.c.l.b16 %v1607
        %v1790 = vunpack.c.l.b16 %v1608
        %v1791 = vunpack.c.l.b16 %v1609
        %v1792 = vunpack.c.l.b16 %v1610
        %v1793 = vunpack.c.l.b16 %v1611
        %v1794 = vunpack.c.l.b16 %v1612
        %v1795 = vunpack.c.l.b16 %v1613
        %v1796 = vunpack.c.l.b16 %v1614
        %v1797 = vunpack.c.l.b16 %v1615
        %v1798 = vpack.c.b16 %v1783, %v1782
        %v1799 = vpack.c.b16 %v1785, %v1784
        %v1800 = vpack.c.b16 %v1787, %v1786
        %v1801 = vpack.c.b16 %v1789, %v1788
        %v1802 = vpack.c.b16 %v1791, %v1790
        %v1803 = vpack.c.b16 %v1793, %v1792
        %v1804 = vpack.c.b16 %v1795, %v1794
        %v1805 = vpack.c.b16 %v1797, %v1796
        %1814 = vmatprep.subr.bf16.mxu0 0
        %1815 = vmatpush1.bf16.msra.mxu0 %v1798
        %1816 = vmatprep.subr.bf16.mxu0 0
        %1817 = vmatpush1.bf16.msra.mxu0 %v1799
        %1818 = vmatprep.subr.bf16.mxu0 0
        %1819 = vmatpush1.bf16.msra.mxu0 %v1800
        %1820 = vmatprep.subr.bf16.mxu0 0
        %1821 = vmatpush1.bf16.msra.mxu0 %v1801
        %1822 = vmatprep.subr.bf16.mxu0 0
        %1823 = vmatpush1.bf16.msra.mxu0 %v1802
        %1824 = vmatprep.subr.bf16.mxu0 0
        %1825 = vmatpush1.bf16.msra.mxu0 %v1803
        %1826 = vmatprep.subr.bf16.mxu0 0
        %1827 = vmatpush1.bf16.msra.mxu0 %v1804
        %1828 = vmatprep.subr.bf16.mxu0 0
        %1829 = vmatpush1.bf16.msra.mxu0 %v1805
        %1830 = vmatprep.subr.bf16.mxu0 0
        %1831 = vmatpush1.bf16.msra.mxu0 0
        %1832 = vmatprep.subr.bf16.mxu0 0
        %1833 = vmatpush1.bf16.msra.mxu0 0
        %1834 = vmatprep.subr.bf16.mxu0 0
        %1835 = vmatpush1.bf16.msra.mxu0 0
        %1836 = vmatprep.subr.bf16.mxu0 0
        %1837 = vmatpush1.bf16.msra.mxu0 0
        %1838 = vmatprep.subr.bf16.mxu0 0
        %1839 = vmatpush1.bf16.msra.mxu0 0
        %1840 = vmatprep.subr.bf16.mxu0 0
        %1841 = vmatpush1.bf16.msra.mxu0 0
        %1842 = vmatprep.subr.bf16.mxu0 0
        %1843 = vmatpush1.bf16.msra.mxu0 0
        %1844 = vmatprep.subr.bf16.mxu0 0
        %1845 = vmatpush1.bf16.msra.mxu0 0
        %1846 = vmatprep.mubr.bf16.mxu0 0
        %1847 = vmatmul.mubr.bf16.gmra.mrb[0].mxu0 %v1616
        %v1848 = vpop.f32.mrb[0].mxu0
        %v1849 = vadd.f32 %v1760, %v1848
        %v1850 = vpop.f32.mrb[0].mxu0
        %v1851 = vpop.f32.mrb[0].mxu0
        %v1852 = vadd.f32 %v1763, %v1851
        %v1853 = vpop.f32.mrb[0].mxu0
        %1854 = vdwg.mxu0
        %s1855 = scalar_lea.vmem [#allocation6], 16
        %v1856 = vld [vmem:[%s1855] sm:$0xf]
        %v1857 = vld [vmem:[%s1855 + $0x4] sm:$0xf]
        %v1858 = vpack.c.bf16 %v1852, %v1849
        %v1861 = vunpack.c.l.b16 %v1856
        %v1862 = vunpack.c.l.b16 %v1857
        %v1863 = vpack.c.b16 %v1862, %v1861
        %v1865 = vsel %vm484, %v1863, 0
        %1867 = vmatprep.subr.bf16.mxu0 0
        %1868 = vmatpush1.bf16.msra.mxu0 %v1858
        %1869 = vmatprep.subr.bf16.mxu0 0
        %1870 = vmatpush1.bf16.msra.mxu0 0
        %1871 = vmatprep.subr.bf16.mxu0 0
        %1872 = vmatpush1.bf16.msra.mxu0 0
        %1873 = vmatprep.subr.bf16.mxu0 0
        %1874 = vmatpush1.bf16.msra.mxu0 0
        %1875 = vmatprep.subr.bf16.mxu0 0
        %1876 = vmatpush1.bf16.msra.mxu0 0
        %1877 = vmatprep.subr.bf16.mxu0 0
        %1878 = vmatpush1.bf16.msra.mxu0 0
        %1879 = vmatprep.subr.bf16.mxu0 0
        %1880 = vmatpush1.bf16.msra.mxu0 0
        %1881 = vmatprep.subr.bf16.mxu0 0
        %1882 = vmatpush1.bf16.msra.mxu0 0
        %1883 = vmatprep.subr.bf16.mxu0 0
        %1884 = vmatpush1.bf16.msra.mxu0 0
        %1885 = vmatprep.subr.bf16.mxu0 0
        %1886 = vmatpush1.bf16.msra.mxu0 0
        %1887 = vmatprep.subr.bf16.mxu0 0
        %1888 = vmatpush1.bf16.msra.mxu0 0
        %1889 = vmatprep.subr.bf16.mxu0 0
        %1890 = vmatpush1.bf16.msra.mxu0 0
        %1891 = vmatprep.subr.bf16.mxu0 0
        %1892 = vmatpush1.bf16.msra.mxu0 0
        %1893 = vmatprep.subr.bf16.mxu0 0
        %1894 = vmatpush1.bf16.msra.mxu0 0
        %1895 = vmatprep.subr.bf16.mxu0 0
        %1896 = vmatpush1.bf16.msra.mxu0 0
        %1897 = vmatprep.subr.bf16.mxu0 0
        %1898 = vmatpush1.bf16.msra.mxu0 0
        %1899 = vmatprep.mubr.bf16.mxu0 0
        %1900 = vmatmul.mubr.bf16.gmra.mrb[0].mxu0 %v1865
        %v1901 = vpop.f32.mrb[0].mxu0
        %v1902 = vadd.f32 0.0, %v1901
        %v1903 = vpop.f32.mrb[0].mxu0
        %v1904 = vpop.f32.mrb[0].mxu0
        %v1905 = vadd.f32 0.0, %v1904
        %v1906 = vpop.f32.mrb[0].mxu0
        %1907 = vdwg.mxu0
        %v1908 = vmax.f32 %v1902, 0.0
        %v1909 = vmax.f32 %v1905, 0.0
        %s1910 = scalar_lea.vmem %s465, 32 [#allocation15]
        %1911 = vst [vmem:[%s1910] sm:$0xff] %v1908
        %1912 = vst [vmem:[%s1910 + $0x8] sm:$0xff] %v1909
        %s1913 = sand.u32 %s249, 1
        %s1914 = sand.u32 %s249, 1
        %s1915 = smul.addr %s1914, 48
        %s1916 = scalar_lea.vmem [#allocation15], %s1915
        // Predicated region
        $region93: #{bgcn_forward.1} parent=59 // pred_check
          %p1917 = pneg %p259
        $region94: #{bgcn_forward.1} parent=59 // pred_check_branch
          %1919 = sbr.rel (%p1917) target = $region96
        $region95: #{bgcn_forward.1} parent=59 // pred_region
          %s1920 = smul.addr %s26, 2
          %s1921 = smul.addr %s1920, 8
          %s1922 = scalar_lea.vmem %s10, %s1921
          // Predicated region
          $region97: #{bgcn_forward.1} parent=95 // pred_check
            _
          $region98: #{bgcn_forward.1} parent=95 // pred_check_branch
            %1924 = sbr.rel (0) target = $region100
          $region99: #{bgcn_forward.1} parent=95 // pred_region
            // Predicated region
            $region101: #{bgcn_forward.1} parent=99 // pred_check
              _
            $region102: #{bgcn_forward.1} parent=99 // pred_check_branch
              %1926 = sbr.rel (0) target = $region104
            $region103: #{bgcn_forward.1} parent=99 // pred_region
              // Predicated region
              $region116: #{bgcn_forward.1} parent=103 // pred_check
                _
              $region117: #{bgcn_forward.1} parent=103 // pred_check_branch
                %1951 = sbr.rel (0) target = $region119
              $region118: #{bgcn_forward.1} parent=103 // pred_region
                loop: start=0, step=1, limit=1
                $region120: #{bgcn_forward.1} parent=118 // loop_pre_header
                  _
                $region121: #{bgcn_forward.1} parent=118 // loop_header
                  %s1953 = sphi 0, %s1957
                  %p1954 = scmp.ge.s32.totalorder %s1953, 1
                  %s1958 = sphi %s1916, %s1916
                  %s1959 = sphi %s1922, %s1922
                $region122: #{bgcn_forward.1} parent=118 // loop_header_branch
                  %1956 = sbr.rel (%p1954) target = $region126
                $region123: #{bgcn_forward.1} parent=118 // loop_body
                  %v1960 = vld [vmem:[%s1958] sm:$0xff]
                  %1961 = vst [vmem:[%s1959] sm:$0xff] %v1960
                  %v1962 = vld [vmem:[%s1958 + $0x8] sm:$0xff]
                  %1963 = vst [vmem:[%s1959 + $0x8] sm:$0xff] %v1962
                  %v1964 = vld [vmem:[%s1958 + $0x10] sm:$0xff]
                  %1965 = vst [vmem:[%s1959 + $0x20] sm:$0xff] %v1964
                  %v1966 = vld [vmem:[%s1958 + $0x18] sm:$0xff]
                  %1967 = vst [vmem:[%s1959 + $0x28] sm:$0xff] %v1966
                  %v1968 = vld [vmem:[%s1958 + $0x20] sm:$0xff]
                  %1969 = vst [vmem:[%s1959 + $0x40] sm:$0xff] %v1968
                  %v1970 = vld [vmem:[%s1958 + $0x28] sm:$0xff]
                  %1971 = vst [vmem:[%s1959 + $0x48] sm:$0xff] %v1970
                $region124: #{bgcn_forward.1} parent=118 // loop_footer
                  %s1957 = sadd.s32 1, %s1953
                $region125: #{bgcn_forward.1} parent=118 // loop_footer_branch
                  %1952 = sbr.rel target = $region121
                $region126: #{bgcn_forward.1} parent=118 // loop_exit
                  _
              $region119: #{bgcn_forward.1} parent=103 // pred_fallthru
                _
              // Predicated region
              $region127: #{bgcn_forward.1} parent=103 // pred_check
                _
              $region128: #{bgcn_forward.1} parent=103 // pred_check_branch
                %1973 = sbr.rel target = $region130
              $region129: #{bgcn_forward.1} parent=103 // pred_region
                _
              $region130: #{bgcn_forward.1} parent=103 // pred_fallthru
                _
            $region104: #{bgcn_forward.1} parent=99 // pred_fallthru
              _
            // Predicated region
            $region105: #{bgcn_forward.1} parent=99 // pred_check
              _
            $region106: #{bgcn_forward.1} parent=99 // pred_check_branch
              %1928 = sbr.rel target = $region108
            $region107: #{bgcn_forward.1} parent=99 // pred_region
              loop: start=0, step=1, limit=1
              $region109: #{bgcn_forward.1} parent=107 // loop_pre_header
                _
              $region110: #{bgcn_forward.1} parent=107 // loop_header
                %s1931 = sphi 0, %s1935
                %p1932 = scmp.ge.s32.totalorder %s1931, 1
                %s1936 = sphi %s1916, %s1916
                %s1937 = sphi %s1922, %s1922
              $region111: #{bgcn_forward.1} parent=107 // loop_header_branch
                %1934 = sbr.rel (%p1932) target = $region115
              $region112: #{bgcn_forward.1} parent=107 // loop_body
                %v1938 = vld [vmem:[%s1936] sm:$0xff]
                %1939 = vst [vmem:[%s1937] sm:$0xff] %v1938
                %v1940 = vld [vmem:[%s1936 + $0x8] sm:$0xff]
                %1941 = vst [vmem:[%s1937 + $0x8] sm:$0xff] %v1940
                %v1942 = vld [vmem:[%s1936 + $0x10] sm:$0xff]
                %1943 = vst [vmem:[%s1937 + $0x20] sm:$0xff] %v1942
                %v1944 = vld [vmem:[%s1936 + $0x18] sm:$0xff]
                %1945 = vst [vmem:[%s1937 + $0x28] sm:$0xff] %v1944
                %v1946 = vld [vmem:[%s1936 + $0x20] sm:$0xff]
                %1947 = vst [vmem:[%s1937 + $0x40] sm:$0xff] %v1946
                %v1948 = vld [vmem:[%s1936 + $0x28] sm:$0xff]
                %1949 = vst [vmem:[%s1937 + $0x48] sm:$0xff] %v1948
              $region113: #{bgcn_forward.1} parent=107 // loop_footer
                %s1935 = sadd.s32 1, %s1931
              $region114: #{bgcn_forward.1} parent=107 // loop_footer_branch
                %1930 = sbr.rel target = $region110
              $region115: #{bgcn_forward.1} parent=107 // loop_exit
                _
            $region108: #{bgcn_forward.1} parent=99 // pred_fallthru
              _
          $region100: #{bgcn_forward.1} parent=95 // pred_fallthru
            _
          %1974 = vnop
        $region96: #{bgcn_forward.1} parent=59 // pred_fallthru
          _
      $region60: #{bgcn_forward.1} parent=5 // pred_fallthru
        _
      %p1975 = scmp.le.s32.totalorder 2, %s21
      // Predicated region
      $region131: #{bgcn_forward.1} parent=5 // pred_check
        %p1976 = pneg %p1975
      $region132: #{bgcn_forward.1} parent=5 // pred_check_branch
        %1978 = sbr.rel (%p1976) target = $region134
      $region133: #{bgcn_forward.1} parent=5 // pred_region
        %s1979 = ssub.s32 %s21, 2
        // Predicated region
        $region135: #{bgcn_forward.1} parent=133 // pred_check
          %p1980 = pneg %p265
        $region136: #{bgcn_forward.1} parent=133 // pred_check_branch
          %1982 = sbr.rel (%p1980) target = $region138
        $region137: #{bgcn_forward.1} parent=133 // pred_region
          %s1983 = sand.u32 %s250, 1
          %s1984 = sand.u32 %s250, 1
          %s1985 = smul.addr %s1984, 48
          %s1986 = scalar_lea.vmem [#allocation15], %s1985
        $region138: #{bgcn_forward.1} parent=133 // pred_fallthru
          _
      $region134: #{bgcn_forward.1} parent=5 // pred_fallthru
        _
    $region6: #{bgcn_forward.1} parent=1 // loop_footer
      %s25 = sadd.s32 1, %s21
    $region7: #{bgcn_forward.1} parent=1 // loop_footer_branch
      %20 = sbr.rel target = $region3
    $region8: #{bgcn_forward.1} parent=1 // loop_exit
      _
    %1987 = vsyncpa [#allocation3], 1
    %s1988 = scalar_lea.sflag [#allocation3], 1
    %1989 = vsyncpa %s1988, 1
    %1990 = vsyncpa [#allocation5], 1
    %1991 = vsyncpa [#allocation8], 1
    %1992 = vsyncpa [#allocation11], 1
    %1993 = vsyncpa [#allocation14], 1

</llo_original>
